<compile_context>
chip_gen: v6e
topology: v6e:2x2x1
jax: 0.10.0
libtpu: 0.0.40
codegen_flags: <defaults>
</compile_context>

<pallas_src>
import functools

import numpy as np
import jax
import jax.numpy as jnp
from jax.experimental import pallas as pl
from jax.experimental.pallas import tpu as pltpu

EPS = 1e-5  # nn.InstanceNorm3d default eps


# ---------------------------------------------------------------------------
# Kernel: whole batch, both convs, both InstanceNorms, ReLU, residual add.
# ---------------------------------------------------------------------------
def _resnet_block_kernel(x_ref, w1_ref, w2_ref, p_ref, pt_ref, o_ref,
                         *, N, D, C, eps):
    """x_ref : (N, D, HWC)        activation, lane layout = (h*W + w)*C + c
       w*_ref: (3*HWC, HWC)       kd-stacked block-Toeplitz conv weights
       p_ref : (HWC, C)           channel-sum matrix
       pt_ref: (C, HWC)           channel-broadcast matrix (P^T)
       o_ref : (N, D, HWC)
    """
    HWC = x_ref.shape[-1]
    inv_n = 1.0 / float(D * (HWC // C))           # 1 / (D*H*W)

    x = x_ref[...].astype(jnp.float32)            # (N, D, HWC)
    p = p_ref[...].astype(jnp.float32)            # (HWC, C)
    pt = pt_ref[...].astype(jnp.float32)          # (C, HWC)

    def conv_instnorm(v, w_ref):
        # Reflection pad along D (pad=1) expressed as two shifted copies, then
        # folded into a single lane-axis widening -> ONE K=3*HWC MXU push.
        v_prev = jnp.concatenate([v[:, 1:2], v[:, :D - 1]], axis=1)      # d-1 (reflect)
        v_next = jnp.concatenate([v[:, 1:], v[:, D - 2:D - 1]], axis=1)  # d+1 (reflect)
        v_wide = jnp.concatenate([v_prev, v, v_next], axis=2)            # (N, D, 3*HWC)
        acc = jnp.dot(v_wide.reshape(N * D, 3 * HWC), w_ref[...],
                      preferred_element_type=jnp.float32)                # (N*D, HWC)
        acc = acc.reshape(N, D, HWC)
        # Conv bias intentionally omitted: cancelled exactly by affine-free IN.

        # InstanceNorm stats (per batch, per channel) -- two stacked matmuls.
        s1 = jnp.sum(acc, axis=1)                                        # (N, HWC)
        s2 = jnp.sum(acc * acc, axis=1)                                  # (N, HWC)
        stats = jnp.dot(jnp.concatenate([s1, s2], axis=0), p,
                        preferred_element_type=jnp.float32)              # (2N, C)
        mean = stats[:N] * inv_n
        var = stats[N:] * inv_n - mean * mean
        inv_std = jax.lax.rsqrt(var + eps)
        coefs = jnp.concatenate([inv_std, -mean * inv_std], axis=0)      # (2N, C)
        coefs_l = jnp.dot(coefs, pt,
                          preferred_element_type=jnp.float32)            # (2N, HWC)
        scale_l = coefs_l[:N][:, None, :]                                # (N, 1, HWC)
        shift_l = coefs_l[N:][:, None, :]
        return acc * scale_l + shift_l                                   # (acc-mean)*inv_std

    h = jnp.maximum(conv_instnorm(x, w1_ref), 0.0)    # conv1 + IN + ReLU
    y = conv_instnorm(h, w2_ref)                      # conv2 + IN
    o_ref[...] = (x + y).astype(o_ref.dtype)          # residual add


# ---------------------------------------------------------------------------
# One-time weight preprocessing (pure numpy, hoisted out of the forward path):
# fold kh/kw taps, channel mixing and H/W reflection padding into a kd-stacked
# block-Toeplitz matrix of shape (3*H*W*C, H*W*C).
# ---------------------------------------------------------------------------
def _reflect(i, n):
    if i < 0:
        return -i
    if i >= n:
        return 2 * n - 2 - i
    return i


def _shift_matrix(n, k):
    """a[src, dst] = 1 iff reflect(dst + k - 1) == src  (reflection pad = 1)."""
    a = np.zeros((n, n), np.float32)
    for j in range(n):
        a[_reflect(j + k - 1, n), j] = 1.0
    return a


def _build_toeplitz_weight(w, H, W):
    """w: (C, C, 3, 3, 3) torch-style Conv3d weight -> (3*H*W*C, H*W*C)."""
    w = np.asarray(w, np.float32)
    C = w.shape[0]
    HWC = H * W * C
    out = np.zeros((3, HWC, HWC), np.float32)
    for kd in range(3):
        for kh in range(3):
            a = _shift_matrix(H, kh)
            for kw in range(3):
                b = _shift_matrix(W, kw)
                ab = np.kron(a, b)                       # (H*W, H*W)
                out[kd] += np.kron(ab, w[:, :, kd, kh, kw].T)  # (Cin, Cout) block
    return out.reshape(3 * HWC, HWC)


def prepare_resnet_block_params(w1, b1, w2, b2, H, W):
    """Host-side, call ONCE per weight update (not per forward).

    b1/b2 are accepted for module fidelity but unused: the conv bias is
    cancelled exactly by the following affine-free InstanceNorm3d.  This
    relies on norm_layer being affine-free instance norm applied directly
    after the conv; revisit if the module config changes.
    """
    del b1, b2
    C = np.asarray(w1).shape[0]
    w1c = jnp.asarray(_build_toeplitz_weight(w1, H, W))     # (3*HWC, HWC)
    w2c = jnp.asarray(_build_toeplitz_weight(w2, H, W))     # (3*HWC, HWC)
    p_np = np.kron(np.ones((H * W, 1), np.float32), np.eye(C, dtype=np.float32))
    p_mat = jnp.asarray(p_np)                                # (HWC, C)
    pt_mat = jnp.asarray(p_np.T)                             # (C, HWC)
    return w1c, w2c, p_mat, pt_mat


# ---------------------------------------------------------------------------
# Public wrapper (jitted; all heavy preprocessing already hoisted out).
# ---------------------------------------------------------------------------
@jax.jit
def resnet_block_forward(x_ncdhw, w1c, w2c, p_mat, pt_mat):
    """x_ncdhw: (N, C, D, H, W).  Returns NCDHW."""
    N, C, D, H, W = x_ncdhw.shape
    assert D >= 2 and H >= 2 and W >= 2, "ReflectionPad3d(1) needs dims >= 2"
    HWC = H * W * C
    assert w1c.shape == (3 * HWC, HWC) and w2c.shape == (3 * HWC, HWC)

    # Scaling cliff of the Toeplitz folding: weights grow as O((HWC)^2).
    weight_bytes = 2 * (3 * HWC) * HWC * 4
    assert weight_bytes <= (24 << 20), (
        "Toeplitz folding is a small-HWC specialization; use an im2col "
        "(rows, 27C)x(27C, C) path for larger H*W*C")
    # TODO(synk): implement the im2col fallback path for large H*W*C.

    # NCDHW -> lane-dense (N, D, H*W*C); best when H*W*C is a multiple of 128.
    x = jnp.transpose(x_ncdhw, (0, 2, 3, 4, 1)).reshape(N, D, HWC)

    kernel = functools.partial(_resnet_block_kernel, N=N, D=D, C=C, eps=EPS)

    out = pl.pallas_call(
        kernel,
        out_shape=jax.ShapeDtypeStruct((N, D, HWC), x.dtype),
        grid_spec=pltpu.PrefetchScalarGridSpec(
            num_scalar_prefetch=0,
            grid=(1,),  # whole batch folded into one block (single-TC friendly)
            in_specs=[
                pl.BlockSpec((N, D, HWC), lambda i: (0, 0, 0)),
                pl.BlockSpec((3 * HWC, HWC), lambda i: (0, 0)),
                pl.BlockSpec((3 * HWC, HWC), lambda i: (0, 0)),
                pl.BlockSpec((HWC, C), lambda i: (0, 0)),
                pl.BlockSpec((C, HWC), lambda i: (0, 0)),
            ],
            out_specs=pl.BlockSpec((N, D, HWC), lambda i: (0, 0, 0)),
        ),
        compiler_params=pltpu.CompilerParams(
            dimension_semantics=("arbitrary",),
            vmem_limit_bytes=32 * 1024 * 1024,
        ),
    )(x, w1c, w2c, p_mat, pt_mat)

    return jnp.transpose(out.reshape(N, D, H, W, C), (0, 4, 1, 2, 3))


# ---------------------------------------------------------------------------
# Pure-JAX reference (mirrors the PyTorch module, bias included)
# ---------------------------------------------------------------------------
def _reference_forward(x_ncdhw, w1, b1, w2, b2):
    def conv_in(x, w, b):
        xp = jnp.pad(x, ((0, 0), (0, 0), (1, 1), (1, 1), (1, 1)), mode="reflect")
        y = jax.lax.conv_general_dilated(
            xp, w, window_strides=(1, 1, 1), padding="VALID",
            dimension_numbers=("NCDHW", "OIDHW", "NCDHW"))
        y = y + b[None, :, None, None, None]
        mean = y.mean(axis=(2, 3, 4), keepdims=True)
        var = ((y - mean) ** 2).mean(axis=(2, 3, 4), keepdims=True)
        return (y - mean) * jax.lax.rsqrt(var + EPS)

    h = jax.nn.relu(conv_in(x_ncdhw, w1, b1))
    return x_ncdhw + conv_in(h, w2, b2)


if __name__ == "__main__":
    key = jax.random.PRNGKey(0)
    k_x, k_w1, k_b1, k_w2, k_b2 = jax.random.split(key, 5)

    N, C, D, H, W = 2, 4, 8, 8, 8
    fan_in = C * 3 * 3 * 3
    scale = 1.0 / jnp.sqrt(fan_in)

    x = jax.random.normal(k_x, (N, C, D, H, W), jnp.float32)
    w1 = jax.random.uniform(k_w1, (C, C, 3, 3, 3), jnp.float32, -scale, scale)
    b1 = jax.random.uniform(k_b1, (C,), jnp.float32, -scale, scale)
    w2 = jax.random.uniform(k_w2, (C, C, 3, 3, 3), jnp.float32, -scale, scale)
    b2 = jax.random.uniform(k_b2, (C,), jnp.float32, -scale, scale)

    # One-time host-side preprocessing (hoisted out of the forward path).
    params = prepare_resnet_block_params(np.asarray(w1), np.asarray(b1),
                                         np.asarray(w2), np.asarray(b2), H, W)

    out = jax.block_until_ready(resnet_block_forward(x, *params))

    ref = jax.block_until_ready(_reference_forward(x, w1, b1, w2, b2))
    assert out.shape == (N, C, D, H, W)
    assert jnp.allclose(out, ref, atol=2e-4, rtol=2e-4), "mismatch vs reference"

    print("KERNEL_OK")
</pallas_src>

<mosaic_0001>
module attributes {stable_mosaic.version = 11 : i64} {
  func.func @_resnet_block_kernel(%arg0: i32, %arg1: memref<2x8x256xf32, #tpu.memory_space<vmem>>, %arg2: memref<768x256xf32, #tpu.memory_space<vmem>>, %arg3: memref<768x256xf32, #tpu.memory_space<vmem>>, %arg4: memref<256x4xf32, #tpu.memory_space<vmem>>, %arg5: memref<4x256xf32, #tpu.memory_space<vmem>>, %arg6: memref<2x8x256xf32, #tpu.memory_space<vmem>>) attributes {dimension_semantics = [#tpu.dimension_semantics<arbitrary>], iteration_bounds = array<i64: 1>, scalar_prefetch = 0 : i64, scratch_operands = 0 : i64, tpu.core_type = #tpu.core_type<tc>, window_params = [{pipeline_mode = #tpu.pipeline_mode<synchronous>, transform_indices = @transform_0, window_bounds = array<i64: 2, 8, 256>}, {pipeline_mode = #tpu.pipeline_mode<synchronous>, transform_indices = @transform_1, window_bounds = array<i64: 768, 256>}, {pipeline_mode = #tpu.pipeline_mode<synchronous>, transform_indices = @transform_2, window_bounds = array<i64: 768, 256>}, {pipeline_mode = #tpu.pipeline_mode<synchronous>, transform_indices = @transform_3, window_bounds = array<i64: 256, 4>}, {pipeline_mode = #tpu.pipeline_mode<synchronous>, transform_indices = @transform_4, window_bounds = array<i64: 4, 256>}, {pipeline_mode = #tpu.pipeline_mode<synchronous>, transform_indices = @transform_5, window_bounds = array<i64: 2, 8, 256>}]} {
    %c0 = arith.constant 0 : index
    %c0_0 = arith.constant 0 : index
    %c0_1 = arith.constant 0 : index
    %0 = vector.load %arg1[%c0, %c0_0, %c0_1] : memref<2x8x256xf32, #tpu.memory_space<vmem>>, vector<2x8x256xf32>
    %c0_2 = arith.constant 0 : index
    %c0_3 = arith.constant 0 : index
    %1 = vector.load %arg4[%c0_2, %c0_3] : memref<256x4xf32, #tpu.memory_space<vmem>>, vector<256x4xf32>
    %c0_4 = arith.constant 0 : index
    %c0_5 = arith.constant 0 : index
    %2 = vector.load %arg5[%c0_4, %c0_5] : memref<4x256xf32, #tpu.memory_space<vmem>>, vector<4x256xf32>
    %3 = vector.extract_strided_slice %0 {offsets = [0, 1, 0], sizes = [2, 1, 256], strides = [1, 1, 1]} : vector<2x8x256xf32> to vector<2x1x256xf32>
    %4 = vector.extract_strided_slice %0 {offsets = [0, 0, 0], sizes = [2, 7, 256], strides = [1, 1, 1]} : vector<2x8x256xf32> to vector<2x7x256xf32>
    %5 = tpu.concatenate %3, %4 in 1 : vector<2x1x256xf32>, vector<2x7x256xf32> -> vector<2x8x256xf32>
    %6 = vector.extract_strided_slice %0 {offsets = [0, 1, 0], sizes = [2, 7, 256], strides = [1, 1, 1]} : vector<2x8x256xf32> to vector<2x7x256xf32>
    %7 = vector.extract_strided_slice %0 {offsets = [0, 6, 0], sizes = [2, 1, 256], strides = [1, 1, 1]} : vector<2x8x256xf32> to vector<2x1x256xf32>
    %8 = tpu.concatenate %6, %7 in 1 : vector<2x7x256xf32>, vector<2x1x256xf32> -> vector<2x8x256xf32>
    %9 = tpu.concatenate %5, %0, %8 in 2 : vector<2x8x256xf32>, vector<2x8x256xf32>, vector<2x8x256xf32> -> vector<2x8x768xf32>
    %10 = vector.shape_cast %9 : vector<2x8x768xf32> to vector<16x768xf32>
    %c0_6 = arith.constant 0 : index
    %c0_7 = arith.constant 0 : index
    %11 = vector.load %arg2[%c0_6, %c0_7] : memref<768x256xf32, #tpu.memory_space<vmem>>, vector<768x256xf32>
    %cst = arith.constant dense<0.000000e+00> : vector<16x256xf32>
    %12 = tpu.matmul %10, %11, %cst {dimension_numbers = #tpu.dot_dimension_numbers<[1], [0], [0], [1], [0, 0, 1, 1], [], []>} : vector<16x768xf32>, vector<768x256xf32>, vector<16x256xf32> -> vector<16x256xf32>
    %13 = vector.shape_cast %12 : vector<16x256xf32> to vector<2x8x256xf32>
    %cst_8 = arith.constant dense<0.000000e+00> : vector<2x256xf32>
    %14 = vector.multi_reduction <add>, %13, %cst_8 [1] : vector<2x8x256xf32> to vector<2x256xf32>
    %15 = arith.mulf %13, %13 : vector<2x8x256xf32>
    %cst_9 = arith.constant dense<0.000000e+00> : vector<2x256xf32>
    %16 = vector.multi_reduction <add>, %15, %cst_9 [1] : vector<2x8x256xf32> to vector<2x256xf32>
    %17 = tpu.concatenate %14, %16 in 0 : vector<2x256xf32>, vector<2x256xf32> -> vector<4x256xf32>
    %cst_10 = arith.constant dense<0.000000e+00> : vector<4x4xf32>
    %18 = tpu.matmul %17, %1, %cst_10 {dimension_numbers = #tpu.dot_dimension_numbers<[1], [0], [0], [1], [0, 0, 1, 1], [], []>} : vector<4x256xf32>, vector<256x4xf32>, vector<4x4xf32> -> vector<4x4xf32>
    %19 = vector.extract_strided_slice %18 {offsets = [0, 0], sizes = [2, 4], strides = [1, 1]} : vector<4x4xf32> to vector<2x4xf32>
    %cst_11 = arith.constant 0.001953125 : f32
    %20 = vector.broadcast %cst_11 : f32 to vector<2x4xf32>
    %21 = arith.mulf %19, %20 : vector<2x4xf32>
    %22 = vector.extract_strided_slice %18 {offsets = [2, 0], sizes = [2, 4], strides = [1, 1]} : vector<4x4xf32> to vector<2x4xf32>
    %cst_12 = arith.constant 0.001953125 : f32
    %23 = vector.broadcast %cst_12 : f32 to vector<2x4xf32>
    %24 = arith.mulf %22, %23 : vector<2x4xf32>
    %25 = arith.mulf %21, %21 : vector<2x4xf32>
    %26 = arith.subf %24, %25 : vector<2x4xf32>
    %cst_13 = arith.constant 9.99999974E-6 : f32
    %27 = vector.broadcast %cst_13 : f32 to vector<2x4xf32>
    %28 = arith.addf %26, %27 : vector<2x4xf32>
    %29 = math.rsqrt %28 : vector<2x4xf32>
    %cst_14 = arith.constant 0.000000e+00 : f32
    %30 = vector.broadcast %cst_14 : f32 to vector<2x4xf32>
    %31 = arith.subf %30, %21 : vector<2x4xf32>
    %32 = arith.mulf %31, %29 : vector<2x4xf32>
    %33 = tpu.concatenate %29, %32 in 0 : vector<2x4xf32>, vector<2x4xf32> -> vector<4x4xf32>
    %cst_15 = arith.constant dense<0.000000e+00> : vector<4x256xf32>
    %34 = tpu.matmul %33, %2, %cst_15 {dimension_numbers = #tpu.dot_dimension_numbers<[1], [0], [0], [1], [0, 0, 1, 1], [], []>} : vector<4x4xf32>, vector<4x256xf32>, vector<4x256xf32> -> vector<4x256xf32>
    %35 = vector.extract_strided_slice %34 {offsets = [0, 0], sizes = [2, 256], strides = [1, 1]} : vector<4x256xf32> to vector<2x256xf32>
    %36 = vector.shape_cast %35 : vector<2x256xf32> to vector<2x1x256xf32>
    %37 = vector.extract_strided_slice %34 {offsets = [2, 0], sizes = [2, 256], strides = [1, 1]} : vector<4x256xf32> to vector<2x256xf32>
    %38 = vector.shape_cast %37 : vector<2x256xf32> to vector<2x1x256xf32>
    %39 = vector.broadcast %36 : vector<2x1x256xf32> to vector<2x8x256xf32>
    %40 = arith.mulf %13, %39 : vector<2x8x256xf32>
    %41 = vector.broadcast %38 : vector<2x1x256xf32> to vector<2x8x256xf32>
    %42 = arith.addf %40, %41 : vector<2x8x256xf32>
    %cst_16 = arith.constant 0.000000e+00 : f32
    %43 = vector.broadcast %cst_16 : f32 to vector<2x8x256xf32>
    %44 = arith.maximumf %42, %43 : vector<2x8x256xf32>
    %45 = vector.extract_strided_slice %44 {offsets = [0, 1, 0], sizes = [2, 1, 256], strides = [1, 1, 1]} : vector<2x8x256xf32> to vector<2x1x256xf32>
    %46 = vector.extract_strided_slice %44 {offsets = [0, 0, 0], sizes = [2, 7, 256], strides = [1, 1, 1]} : vector<2x8x256xf32> to vector<2x7x256xf32>
    %47 = tpu.concatenate %45, %46 in 1 : vector<2x1x256xf32>, vector<2x7x256xf32> -> vector<2x8x256xf32>
    %48 = vector.extract_strided_slice %44 {offsets = [0, 1, 0], sizes = [2, 7, 256], strides = [1, 1, 1]} : vector<2x8x256xf32> to vector<2x7x256xf32>
    %49 = vector.extract_strided_slice %44 {offsets = [0, 6, 0], sizes = [2, 1, 256], strides = [1, 1, 1]} : vector<2x8x256xf32> to vector<2x1x256xf32>
    %50 = tpu.concatenate %48, %49 in 1 : vector<2x7x256xf32>, vector<2x1x256xf32> -> vector<2x8x256xf32>
    %51 = tpu.concatenate %47, %44, %50 in 2 : vector<2x8x256xf32>, vector<2x8x256xf32>, vector<2x8x256xf32> -> vector<2x8x768xf32>
    %52 = vector.shape_cast %51 : vector<2x8x768xf32> to vector<16x768xf32>
    %c0_17 = arith.constant 0 : index
    %c0_18 = arith.constant 0 : index
    %53 = vector.load %arg3[%c0_17, %c0_18] : memref<768x256xf32, #tpu.memory_space<vmem>>, vector<768x256xf32>
    %cst_19 = arith.constant dense<0.000000e+00> : vector<16x256xf32>
    %54 = tpu.matmul %52, %53, %cst_19 {dimension_numbers = #tpu.dot_dimension_numbers<[1], [0], [0], [1], [0, 0, 1, 1], [], []>} : vector<16x768xf32>, vector<768x256xf32>, vector<16x256xf32> -> vector<16x256xf32>
    %55 = vector.shape_cast %54 : vector<16x256xf32> to vector<2x8x256xf32>
    %cst_20 = arith.constant dense<0.000000e+00> : vector<2x256xf32>
    %56 = vector.multi_reduction <add>, %55, %cst_20 [1] : vector<2x8x256xf32> to vector<2x256xf32>
    %57 = arith.mulf %55, %55 : vector<2x8x256xf32>
    %cst_21 = arith.constant dense<0.000000e+00> : vector<2x256xf32>
    %58 = vector.multi_reduction <add>, %57, %cst_21 [1] : vector<2x8x256xf32> to vector<2x256xf32>
    %59 = tpu.concatenate %56, %58 in 0 : vector<2x256xf32>, vector<2x256xf32> -> vector<4x256xf32>
    %cst_22 = arith.constant dense<0.000000e+00> : vector<4x4xf32>
    %60 = tpu.matmul %59, %1, %cst_22 {dimension_numbers = #tpu.dot_dimension_numbers<[1], [0], [0], [1], [0, 0, 1, 1], [], []>} : vector<4x256xf32>, vector<256x4xf32>, vector<4x4xf32> -> vector<4x4xf32>
    %61 = vector.extract_strided_slice %60 {offsets = [0, 0], sizes = [2, 4], strides = [1, 1]} : vector<4x4xf32> to vector<2x4xf32>
    %cst_23 = arith.constant 0.001953125 : f32
    %62 = vector.broadcast %cst_23 : f32 to vector<2x4xf32>
    %63 = arith.mulf %61, %62 : vector<2x4xf32>
    %64 = vector.extract_strided_slice %60 {offsets = [2, 0], sizes = [2, 4], strides = [1, 1]} : vector<4x4xf32> to vector<2x4xf32>
    %cst_24 = arith.constant 0.001953125 : f32
    %65 = vector.broadcast %cst_24 : f32 to vector<2x4xf32>
    %66 = arith.mulf %64, %65 : vector<2x4xf32>
    %67 = arith.mulf %63, %63 : vector<2x4xf32>
    %68 = arith.subf %66, %67 : vector<2x4xf32>
    %cst_25 = arith.constant 9.99999974E-6 : f32
    %69 = vector.broadcast %cst_25 : f32 to vector<2x4xf32>
    %70 = arith.addf %68, %69 : vector<2x4xf32>
    %71 = math.rsqrt %70 : vector<2x4xf32>
    %cst_26 = arith.constant 0.000000e+00 : f32
    %72 = vector.broadcast %cst_26 : f32 to vector<2x4xf32>
    %73 = arith.subf %72, %63 : vector<2x4xf32>
    %74 = arith.mulf %73, %71 : vector<2x4xf32>
    %75 = tpu.concatenate %71, %74 in 0 : vector<2x4xf32>, vector<2x4xf32> -> vector<4x4xf32>
    %cst_27 = arith.constant dense<0.000000e+00> : vector<4x256xf32>
    %76 = tpu.matmul %75, %2, %cst_27 {dimension_numbers = #tpu.dot_dimension_numbers<[1], [0], [0], [1], [0, 0, 1, 1], [], []>} : vector<4x4xf32>, vector<4x256xf32>, vector<4x256xf32> -> vector<4x256xf32>
    %77 = vector.extract_strided_slice %76 {offsets = [0, 0], sizes = [2, 256], strides = [1, 1]} : vector<4x256xf32> to vector<2x256xf32>
    %78 = vector.shape_cast %77 : vector<2x256xf32> to vector<2x1x256xf32>
    %79 = vector.extract_strided_slice %76 {offsets = [2, 0], sizes = [2, 256], strides = [1, 1]} : vector<4x256xf32> to vector<2x256xf32>
    %80 = vector.shape_cast %79 : vector<2x256xf32> to vector<2x1x256xf32>
    %81 = vector.broadcast %78 : vector<2x1x256xf32> to vector<2x8x256xf32>
    %82 = arith.mulf %55, %81 : vector<2x8x256xf32>
    %83 = vector.broadcast %80 : vector<2x1x256xf32> to vector<2x8x256xf32>
    %84 = arith.addf %82, %83 : vector<2x8x256xf32>
    %85 = arith.addf %0, %84 : vector<2x8x256xf32>
    %c0_28 = arith.constant 0 : index
    %c0_29 = arith.constant 0 : index
    %c0_30 = arith.constant 0 : index
    %86 = vector.load %arg6[%c0_28, %c0_29, %c0_30] : memref<2x8x256xf32, #tpu.memory_space<vmem>>, vector<2x8x256xf32>
    tpu.vector_store %arg6[%c0_28, %c0_29, %c0_30], %85 {strides = array<i32>} : memref<2x8x256xf32, #tpu.memory_space<vmem>>, vector<2x8x256xf32>,
    return
  }
  func.func @transform_0(%arg0: i32) -> (i32, i32, i32) {
    %c0_i32 = arith.constant 0 : i32
    %c0_i32_0 = arith.constant 0 : i32
    %c0_i32_1 = arith.constant 0 : i32
    %c0_i32_2 = arith.constant 0 : i32
    return %c0_i32, %c0_i32_0, %c0_i32_1 : i32, i32, i32
  }
  func.func @transform_1(%arg0: i32) -> (i32, i32) {
    %c0_i32 = arith.constant 0 : i32
    %c0_i32_0 = arith.constant 0 : i32
    %c0_i32_1 = arith.constant 0 : i32
    return %c0_i32, %c0_i32_0 : i32, i32
  }
  func.func @transform_2(%arg0: i32) -> (i32, i32) {
    %c0_i32 = arith.constant 0 : i32
    %c0_i32_0 = arith.constant 0 : i32
    %c0_i32_1 = arith.constant 0 : i32
    return %c0_i32, %c0_i32_0 : i32, i32
  }
  func.func @transform_3(%arg0: i32) -> (i32, i32) {
    %c0_i32 = arith.constant 0 : i32
    %c0_i32_0 = arith.constant 0 : i32
    %c0_i32_1 = arith.constant 0 : i32
    return %c0_i32, %c0_i32_0 : i32, i32
  }
  func.func @transform_4(%arg0: i32) -> (i32, i32) {
    %c0_i32 = arith.constant 0 : i32
    %c0_i32_0 = arith.constant 0 : i32
    %c0_i32_1 = arith.constant 0 : i32
    return %c0_i32, %c0_i32_0 : i32, i32
  }
  func.func @transform_5(%arg0: i32) -> (i32, i32, i32) {
    %c0_i32 = arith.constant 0 : i32
    %c0_i32_0 = arith.constant 0 : i32
    %c0_i32_1 = arith.constant 0 : i32
    %c0_i32_2 = arith.constant 0 : i32
    return %c0_i32, %c0_i32_0, %c0_i32_1 : i32, i32, i32
  }
}

</mosaic_0001>

<llo_original>
// kernel: resnet_block_forward.1
$region0: #{resnet_block_forward.1}
  #allocation0 [shape = 'u32[]', space=smem, size = 0x4, offset = 0x4, fixed_abs, tag = 'smem constant byte address 0x4 - core index']
  #allocation1 [shape = 'u32[144,128]{1,0:T(1,128)}', space=vmem, size = 0x12000, scoped, tag = 'internal scratch']
  %s0 = inlined_call_operand.vmem [shape: f32[2,8,256], index: 0, kind: input, shape index: {}]
  %s1 = inlined_call_operand.vmem [shape: f32[768,256], index: 1, kind: input, shape index: {}]
  %s2 = inlined_call_operand.hbm [shape: f32[768,256], index: 2, kind: input, shape index: {}]
  %s3 = inlined_call_operand.vmem [shape: f32[256,4], index: 3, kind: input, shape index: {}]
  %s4 = inlined_call_operand.vmem [shape: f32[4,256], index: 4, kind: input, shape index: {}]
  %s5 = inlined_call_operand.vmem [shape: f32[2,8,256], index: 5, kind: output, shape index: {}]
  %s6 = sld [smem:[#allocation0]]
  $region34: #{resnet_block_forward.1} parent=0
    _
  %s8 = ssub.s32 1, %s6
  %s9 = scalar_select 0, %s8, %s6
  $region1: #{resnet_block_forward.1} parent=0
    #allocation2 [shape = 'u8[786432]{0}', space=vmem, size = 0xc0000, scoped, tag = 'input window, operand 2, single buffered']
    #allocation3 [shape = 's32[1]{0}', space=sflag, size = 0x4, scoped, tag = 'scoped memory for resnet_block_forward.1']
    %10 = vsyncpa [#allocation3], 0
    // Predicated region
    $region2: #{resnet_block_forward.1} parent=1 // pred_check
      _
    $region3: #{resnet_block_forward.1} parent=1 // pred_check_branch
      %12 = sbr.rel (0) target = $region5
    $region4: #{resnet_block_forward.1} parent=1 // pred_region
      _
    $region5: #{resnet_block_forward.1} parent=1 // pred_fallthru
      _
    // Predicated region
    $region6: #{resnet_block_forward.1} parent=1 // pred_check
      _
    $region7: #{resnet_block_forward.1} parent=1 // pred_check_branch
      %14 = sbr.rel (0) target = $region9
    $region8: #{resnet_block_forward.1} parent=1 // pred_region
      _
    $region9: #{resnet_block_forward.1} parent=1 // pred_fallthru
      _
    // Predicated region
    $region10: #{resnet_block_forward.1} parent=1 // pred_check
      _
    $region11: #{resnet_block_forward.1} parent=1 // pred_check_branch
      %16 = sbr.rel (0) target = $region13
    $region12: #{resnet_block_forward.1} parent=1 // pred_region
      %s18 = ssub.s32 24576, 24576
      %19 = vsyncadd [#allocation3], %s18
      %s20 = sshll.u32 [#allocation2], 4
      %s21 = int_to_ptr.vmem [resolvable:$true] %s20
      %26 = dma.hbm_to_vmem [thread:$0]  %s2, 24576, %s21, [#allocation3], 256, 256, 16
    $region13: #{resnet_block_forward.1} parent=1 // pred_fallthru
      _
    // Predicated region
    $region14: #{resnet_block_forward.1} parent=1 // pred_check
      _
    $region15: #{resnet_block_forward.1} parent=1 // pred_check_branch
      %28 = sbr.rel (0) target = $region17
    $region16: #{resnet_block_forward.1} parent=1 // pred_region
      _
    $region17: #{resnet_block_forward.1} parent=1 // pred_fallthru
      _
    // Predicated region
    $region18: #{resnet_block_forward.1} parent=1 // pred_check
      _
    $region19: #{resnet_block_forward.1} parent=1 // pred_check_branch
      %30 = sbr.rel (0) target = $region21
    $region20: #{resnet_block_forward.1} parent=1 // pred_region
      _
    $region21: #{resnet_block_forward.1} parent=1 // pred_fallthru
      _
    // Predicated region
    $region22: #{resnet_block_forward.1} parent=1 // pred_check
      _
    $region23: #{resnet_block_forward.1} parent=1 // pred_check_branch
      %32 = sbr.rel (0) target = $region25
    $region24: #{resnet_block_forward.1} parent=1 // pred_region
      %33 = dma.done [#allocation3], 24576
    $region25: #{resnet_block_forward.1} parent=1 // pred_fallthru
      _
    %v34 = vld [vmem:[%s0] sm:$0xff]
    %v35 = vld [vmem:[%s0 + $0x8] sm:$0xff]
    %v36 = vld [vmem:[%s0 + $0x10] sm:$0xff]
    %v37 = vld [vmem:[%s0 + $0x18] sm:$0xff]
    %v38 = vld [vmem:[%s3] sm:$0xff]
    %v39 = vld [vmem:[%s3 + $0x8] sm:$0xff]
    %v40 = vld [vmem:[%s3 + $0x10] sm:$0xff]
    %v41 = vld [vmem:[%s3 + $0x18] sm:$0xff]
    %v42 = vld [vmem:[%s3 + $0x20] sm:$0xff]
    %v43 = vld [vmem:[%s3 + $0x28] sm:$0xff]
    %v44 = vld [vmem:[%s3 + $0x30] sm:$0xff]
    %v45 = vld [vmem:[%s3 + $0x38] sm:$0xff]
    %v46 = vld [vmem:[%s3 + $0x40] sm:$0xff]
    %v47 = vld [vmem:[%s3 + $0x48] sm:$0xff]
    %v48 = vld [vmem:[%s3 + $0x50] sm:$0xff]
    %v49 = vld [vmem:[%s3 + $0x58] sm:$0xff]
    %v50 = vld [vmem:[%s3 + $0x60] sm:$0xff]
    %v51 = vld [vmem:[%s3 + $0x68] sm:$0xff]
    %v52 = vld [vmem:[%s3 + $0x70] sm:$0xff]
    %v53 = vld [vmem:[%s3 + $0x78] sm:$0xff]
    %v54 = vld [vmem:[%s3 + $0x80] sm:$0xff]
    %v55 = vld [vmem:[%s3 + $0x88] sm:$0xff]
    %v56 = vld [vmem:[%s3 + $0x90] sm:$0xff]
    %v57 = vld [vmem:[%s3 + $0x98] sm:$0xff]
    %v58 = vld [vmem:[%s3 + $0xa0] sm:$0xff]
    %v59 = vld [vmem:[%s3 + $0xa8] sm:$0xff]
    %v60 = vld [vmem:[%s3 + $0xb0] sm:$0xff]
    %v61 = vld [vmem:[%s3 + $0xb8] sm:$0xff]
    %v62 = vld [vmem:[%s3 + $0xc0] sm:$0xff]
    %v63 = vld [vmem:[%s3 + $0xc8] sm:$0xff]
    %v64 = vld [vmem:[%s3 + $0xd0] sm:$0xff]
    %v65 = vld [vmem:[%s3 + $0xd8] sm:$0xff]
    %v66 = vld [vmem:[%s3 + $0xe0] sm:$0xff]
    %v67 = vld [vmem:[%s3 + $0xe8] sm:$0xff]
    %v68 = vld [vmem:[%s3 + $0xf0] sm:$0xff]
    %v69 = vld [vmem:[%s3 + $0xf8] sm:$0xff]
    %v70 = vld [vmem:[%s4] sm:$0xff]
    %v75 = vrot.slane %v34, 1
    %v76 = vrot.slane %v35, 1
    %v77 = vrot.slane %v36, 1
    %v78 = vrot.slane %v37, 1
    %v83 = vrot.slane %v34, 7
    %v84 = vrot.slane %v35, 7
    %v85 = vrot.slane %v36, 7
    %v86 = vrot.slane %v37, 7
    %vm91 = vcmask 1040384
    %v92 = vsel %vm91, %v75, %v83
    %v93 = vsel %vm91, %v76, %v84
    %v94 = vsel %vm91, %v77, %v85
    %v95 = vsel %vm91, %v78, %v86
    %vm96 = vcmask 1046528
    %v97 = vsel %vm96, %v75, %v83
    %v98 = vsel %vm96, %v76, %v84
    %v99 = vsel %vm96, %v77, %v85
    %v100 = vsel %vm96, %v78, %v86
    %v101 = vld [vmem:[%s1] sm:$0xff]
    %v102 = vld [vmem:[%s1 + $0x8] sm:$0xff]
    %v103 = vld [vmem:[%s1 + $0x10] sm:$0xff]
    %v104 = vld [vmem:[%s1 + $0x18] sm:$0xff]
    %v105 = vld [vmem:[%s1 + $0x20] sm:$0xff]
    %v106 = vld [vmem:[%s1 + $0x28] sm:$0xff]
    %v107 = vld [vmem:[%s1 + $0x30] sm:$0xff]
    %v108 = vld [vmem:[%s1 + $0x38] sm:$0xff]
    %v109 = vld [vmem:[%s1 + $0x40] sm:$0xff]
    %v110 = vld [vmem:[%s1 + $0x48] sm:$0xff]
    %v111 = vld [vmem:[%s1 + $0x50] sm:$0xff]
    %v112 = vld [vmem:[%s1 + $0x58] sm:$0xff]
    %v113 = vld [vmem:[%s1 + $0x60] sm:$0xff]
    %v114 = vld [vmem:[%s1 + $0x68] sm:$0xff]
    %v115 = vld [vmem:[%s1 + $0x70] sm:$0xff]
    %v116 = vld [vmem:[%s1 + $0x78] sm:$0xff]
    %v117 = vld [vmem:[%s1 + $0x80] sm:$0xff]
    %v118 = vld [vmem:[%s1 + $0x88] sm:$0xff]
    %v119 = vld [vmem:[%s1 + $0x90] sm:$0xff]
    %v120 = vld [vmem:[%s1 + $0x98] sm:$0xff]
    %v121 = vld [vmem:[%s1 + $0xa0] sm:$0xff]
    %v122 = vld [vmem:[%s1 + $0xa8] sm:$0xff]
    %v123 = vld [vmem:[%s1 + $0xb0] sm:$0xff]
    %v124 = vld [vmem:[%s1 + $0xb8] sm:$0xff]
    %v125 = vld [vmem:[%s1 + $0xc0] sm:$0xff]
    %v126 = vld [vmem:[%s1 + $0xc8] sm:$0xff]
    %v127 = vld [vmem:[%s1 + $0xd0] sm:$0xff]
    %v128 = vld [vmem:[%s1 + $0xd8] sm:$0xff]
    %v129 = vld [vmem:[%s1 + $0xe0] sm:$0xff]
    %v130 = vld [vmem:[%s1 + $0xe8] sm:$0xff]
    %v131 = vld [vmem:[%s1 + $0xf0] sm:$0xff]
    %v132 = vld [vmem:[%s1 + $0xf8] sm:$0xff]
    %v133 = vld [vmem:[%s1 + $0x100] sm:$0xff]
    %v134 = vld [vmem:[%s1 + $0x108] sm:$0xff]
    %v135 = vld [vmem:[%s1 + $0x110] sm:$0xff]
    %v136 = vld [vmem:[%s1 + $0x118] sm:$0xff]
    %v137 = vld [vmem:[%s1 + $0x120] sm:$0xff]
    %v138 = vld [vmem:[%s1 + $0x128] sm:$0xff]
    %v139 = vld [vmem:[%s1 + $0x130] sm:$0xff]
    %v140 = vld [vmem:[%s1 + $0x138] sm:$0xff]
    %v141 = vld [vmem:[%s1 + $0x140] sm:$0xff]
    %v142 = vld [vmem:[%s1 + $0x148] sm:$0xff]
    %v143 = vld [vmem:[%s1 + $0x150] sm:$0xff]
    %v144 = vld [vmem:[%s1 + $0x158] sm:$0xff]
    %v145 = vld [vmem:[%s1 + $0x160] sm:$0xff]
    %v146 = vld [vmem:[%s1 + $0x168] sm:$0xff]
    %v147 = vld [vmem:[%s1 + $0x170] sm:$0xff]
    %v148 = vld [vmem:[%s1 + $0x178] sm:$0xff]
    %v149 = vld [vmem:[%s1 + $0x180] sm:$0xff]
    %v150 = vld [vmem:[%s1 + $0x188] sm:$0xff]
    %v151 = vld [vmem:[%s1 + $0x190] sm:$0xff]
    %v152 = vld [vmem:[%s1 + $0x198] sm:$0xff]
    %v153 = vld [vmem:[%s1 + $0x1a0] sm:$0xff]
    %v154 = vld [vmem:[%s1 + $0x1a8] sm:$0xff]
    %v155 = vld [vmem:[%s1 + $0x1b0] sm:$0xff]
    %v156 = vld [vmem:[%s1 + $0x1b8] sm:$0xff]
    %v157 = vld [vmem:[%s1 + $0x1c0] sm:$0xff]
    %v158 = vld [vmem:[%s1 + $0x1c8] sm:$0xff]
    %v159 = vld [vmem:[%s1 + $0x1d0] sm:$0xff]
    %v160 = vld [vmem:[%s1 + $0x1d8] sm:$0xff]
    %v161 = vld [vmem:[%s1 + $0x1e0] sm:$0xff]
    %v162 = vld [vmem:[%s1 + $0x1e8] sm:$0xff]
    %v163 = vld [vmem:[%s1 + $0x1f0] sm:$0xff]
    %v164 = vld [vmem:[%s1 + $0x1f8] sm:$0xff]
    %v165 = vld [vmem:[%s1 + $0x200] sm:$0xff]
    %v166 = vld [vmem:[%s1 + $0x208] sm:$0xff]
    %v167 = vld [vmem:[%s1 + $0x210] sm:$0xff]
    %v168 = vld [vmem:[%s1 + $0x218] sm:$0xff]
    %v169 = vld [vmem:[%s1 + $0x220] sm:$0xff]
    %v170 = vld [vmem:[%s1 + $0x228] sm:$0xff]
    %v171 = vld [vmem:[%s1 + $0x230] sm:$0xff]
    %v172 = vld [vmem:[%s1 + $0x238] sm:$0xff]
    %v173 = vld [vmem:[%s1 + $0x240] sm:$0xff]
    %v174 = vld [vmem:[%s1 + $0x248] sm:$0xff]
    %v175 = vld [vmem:[%s1 + $0x250] sm:$0xff]
    %v176 = vld [vmem:[%s1 + $0x258] sm:$0xff]
    %v177 = vld [vmem:[%s1 + $0x260] sm:$0xff]
    %v178 = vld [vmem:[%s1 + $0x268] sm:$0xff]
    %v179 = vld [vmem:[%s1 + $0x270] sm:$0xff]
    %v180 = vld [vmem:[%s1 + $0x278] sm:$0xff]
    %v181 = vld [vmem:[%s1 + $0x280] sm:$0xff]
    %v182 = vld [vmem:[%s1 + $0x288] sm:$0xff]
    %v183 = vld [vmem:[%s1 + $0x290] sm:$0xff]
    %v184 = vld [vmem:[%s1 + $0x298] sm:$0xff]
    %v185 = vld [vmem:[%s1 + $0x2a0] sm:$0xff]
    %v186 = vld [vmem:[%s1 + $0x2a8] sm:$0xff]
    %v187 = vld [vmem:[%s1 + $0x2b0] sm:$0xff]
    %v188 = vld [vmem:[%s1 + $0x2b8] sm:$0xff]
    %v189 = vld [vmem:[%s1 + $0x2c0] sm:$0xff]
    %v190 = vld [vmem:[%s1 + $0x2c8] sm:$0xff]
    %v191 = vld [vmem:[%s1 + $0x2d0] sm:$0xff]
    %v192 = vld [vmem:[%s1 + $0x2d8] sm:$0xff]
    %v193 = vld [vmem:[%s1 + $0x2e0] sm:$0xff]
    %v194 = vld [vmem:[%s1 + $0x2e8] sm:$0xff]
    %v195 = vld [vmem:[%s1 + $0x2f0] sm:$0xff]
    %v196 = vld [vmem:[%s1 + $0x2f8] sm:$0xff]
    %v197 = vld [vmem:[%s1 + $0x300] sm:$0xff]
    %v198 = vld [vmem:[%s1 + $0x308] sm:$0xff]
    %v199 = vld [vmem:[%s1 + $0x310] sm:$0xff]
    %v200 = vld [vmem:[%s1 + $0x318] sm:$0xff]
    %v201 = vld [vmem:[%s1 + $0x320] sm:$0xff]
    %v202 = vld [vmem:[%s1 + $0x328] sm:$0xff]
    %v203 = vld [vmem:[%s1 + $0x330] sm:$0xff]
    %v204 = vld [vmem:[%s1 + $0x338] sm:$0xff]
    %v205 = vld [vmem:[%s1 + $0x340] sm:$0xff]
    %v206 = vld [vmem:[%s1 + $0x348] sm:$0xff]
    %v207 = vld [vmem:[%s1 + $0x350] sm:$0xff]
    %v208 = vld [vmem:[%s1 + $0x358] sm:$0xff]
    %v209 = vld [vmem:[%s1 + $0x360] sm:$0xff]
    %v210 = vld [vmem:[%s1 + $0x368] sm:$0xff]
    %v211 = vld [vmem:[%s1 + $0x370] sm:$0xff]
    %v212 = vld [vmem:[%s1 + $0x378] sm:$0xff]
    %v213 = vld [vmem:[%s1 + $0x380] sm:$0xff]
    %v214 = vld [vmem:[%s1 + $0x388] sm:$0xff]
    %v215 = vld [vmem:[%s1 + $0x390] sm:$0xff]
    %v216 = vld [vmem:[%s1 + $0x398] sm:$0xff]
    %v217 = vld [vmem:[%s1 + $0x3a0] sm:$0xff]
    %v218 = vld [vmem:[%s1 + $0x3a8] sm:$0xff]
    %v219 = vld [vmem:[%s1 + $0x3b0] sm:$0xff]
    %v220 = vld [vmem:[%s1 + $0x3b8] sm:$0xff]
    %v221 = vld [vmem:[%s1 + $0x3c0] sm:$0xff]
    %v222 = vld [vmem:[%s1 + $0x3c8] sm:$0xff]
    %v223 = vld [vmem:[%s1 + $0x3d0] sm:$0xff]
    %v224 = vld [vmem:[%s1 + $0x3d8] sm:$0xff]
    %v225 = vld [vmem:[%s1 + $0x3e0] sm:$0xff]
    %v226 = vld [vmem:[%s1 + $0x3e8] sm:$0xff]
    %v227 = vld [vmem:[%s1 + $0x3f0] sm:$0xff]
    %v228 = vld [vmem:[%s1 + $0x3f8] sm:$0xff]
    %v229 = vld [vmem:[%s1 + $0x400] sm:$0xff]
    %v230 = vld [vmem:[%s1 + $0x408] sm:$0xff]
    %v231 = vld [vmem:[%s1 + $0x410] sm:$0xff]
    %v232 = vld [vmem:[%s1 + $0x418] sm:$0xff]
    %v233 = vld [vmem:[%s1 + $0x420] sm:$0xff]
    %v234 = vld [vmem:[%s1 + $0x428] sm:$0xff]
    %v235 = vld [vmem:[%s1 + $0x430] sm:$0xff]
    %v236 = vld [vmem:[%s1 + $0x438] sm:$0xff]
    %v237 = vld [vmem:[%s1 + $0x440] sm:$0xff]
    %v238 = vld [vmem:[%s1 + $0x448] sm:$0xff]
    %v239 = vld [vmem:[%s1 + $0x450] sm:$0xff]
    %v240 = vld [vmem:[%s1 + $0x458] sm:$0xff]
    %v241 = vld [vmem:[%s1 + $0x460] sm:$0xff]
    %v242 = vld [vmem:[%s1 + $0x468] sm:$0xff]
    %v243 = vld [vmem:[%s1 + $0x470] sm:$0xff]
    %v244 = vld [vmem:[%s1 + $0x478] sm:$0xff]
    %v245 = vld [vmem:[%s1 + $0x480] sm:$0xff]
    %v246 = vld [vmem:[%s1 + $0x488] sm:$0xff]
    %v247 = vld [vmem:[%s1 + $0x490] sm:$0xff]
    %v248 = vld [vmem:[%s1 + $0x498] sm:$0xff]
    %v249 = vld [vmem:[%s1 + $0x4a0] sm:$0xff]
    %v250 = vld [vmem:[%s1 + $0x4a8] sm:$0xff]
    %v251 = vld [vmem:[%s1 + $0x4b0] sm:$0xff]
    %v252 = vld [vmem:[%s1 + $0x4b8] sm:$0xff]
    %v253 = vld [vmem:[%s1 + $0x4c0] sm:$0xff]
    %v254 = vld [vmem:[%s1 + $0x4c8] sm:$0xff]
    %v255 = vld [vmem:[%s1 + $0x4d0] sm:$0xff]
    %v256 = vld [vmem:[%s1 + $0x4d8] sm:$0xff]
    %v257 = vld [vmem:[%s1 + $0x4e0] sm:$0xff]
    %v258 = vld [vmem:[%s1 + $0x4e8] sm:$0xff]
    %v259 = vld [vmem:[%s1 + $0x4f0] sm:$0xff]
    %v260 = vld [vmem:[%s1 + $0x4f8] sm:$0xff]
    %v261 = vld [vmem:[%s1 + $0x500] sm:$0xff]
    %v262 = vld [vmem:[%s1 + $0x508] sm:$0xff]
    %v263 = vld [vmem:[%s1 + $0x510] sm:$0xff]
    %v264 = vld [vmem:[%s1 + $0x518] sm:$0xff]
    %v265 = vld [vmem:[%s1 + $0x520] sm:$0xff]
    %v266 = vld [vmem:[%s1 + $0x528] sm:$0xff]
    %v267 = vld [vmem:[%s1 + $0x530] sm:$0xff]
    %v268 = vld [vmem:[%s1 + $0x538] sm:$0xff]
    %v269 = vld [vmem:[%s1 + $0x540] sm:$0xff]
    %v270 = vld [vmem:[%s1 + $0x548] sm:$0xff]
    %v271 = vld [vmem:[%s1 + $0x550] sm:$0xff]
    %v272 = vld [vmem:[%s1 + $0x558] sm:$0xff]
    %v273 = vld [vmem:[%s1 + $0x560] sm:$0xff]
    %v274 = vld [vmem:[%s1 + $0x568] sm:$0xff]
    %v275 = vld [vmem:[%s1 + $0x570] sm:$0xff]
    %v276 = vld [vmem:[%s1 + $0x578] sm:$0xff]
    %v277 = vld [vmem:[%s1 + $0x580] sm:$0xff]
    %v278 = vld [vmem:[%s1 + $0x588] sm:$0xff]
    %v279 = vld [vmem:[%s1 + $0x590] sm:$0xff]
    %v280 = vld [vmem:[%s1 + $0x598] sm:$0xff]
    %v281 = vld [vmem:[%s1 + $0x5a0] sm:$0xff]
    %v282 = vld [vmem:[%s1 + $0x5a8] sm:$0xff]
    %v283 = vld [vmem:[%s1 + $0x5b0] sm:$0xff]
    %v284 = vld [vmem:[%s1 + $0x5b8] sm:$0xff]
    %v285 = vld [vmem:[%s1 + $0x5c0] sm:$0xff]
    %v286 = vld [vmem:[%s1 + $0x5c8] sm:$0xff]
    %v287 = vld [vmem:[%s1 + $0x5d0] sm:$0xff]
    %v288 = vld [vmem:[%s1 + $0x5d8] sm:$0xff]
    %v289 = vld [vmem:[%s1 + $0x5e0] sm:$0xff]
    %v290 = vld [vmem:[%s1 + $0x5e8] sm:$0xff]
    %v291 = vld [vmem:[%s1 + $0x5f0] sm:$0xff]
    %v292 = vld [vmem:[%s1 + $0x5f8] sm:$0xff]
    %293 = vmatprep.subr.mxu0 %v132
    %294 = vmatpush1.msra.mxu0 %v131
    %295 = vmatprep.subr.mxu0 %v130
    %296 = vmatpush1.msra.mxu0 %v129
    %297 = vmatprep.subr.mxu0 %v128
    %298 = vmatpush1.msra.mxu0 %v127
    %299 = vmatprep.subr.mxu0 %v126
    %300 = vmatpush1.msra.mxu0 %v125
    %301 = vmatprep.subr.mxu0 %v124
    %302 = vmatpush1.msra.mxu0 %v123
    %303 = vmatprep.subr.mxu0 %v122
    %304 = vmatpush1.msra.mxu0 %v121
    %305 = vmatprep.subr.mxu0 %v120
    %306 = vmatpush1.msra.mxu0 %v119
    %307 = vmatprep.subr.mxu0 %v118
    %308 = vmatpush1.msra.mxu0 %v117
    %309 = vmatprep.subr.mxu0 %v116
    %310 = vmatpush1.msra.mxu0 %v115
    %311 = vmatprep.subr.mxu0 %v114
    %312 = vmatpush1.msra.mxu0 %v113
    %313 = vmatprep.subr.mxu0 %v112
    %314 = vmatpush1.msra.mxu0 %v111
    %315 = vmatprep.subr.mxu0 %v110
    %316 = vmatpush1.msra.mxu0 %v109
    %317 = vmatprep.subr.mxu0 %v108
    %318 = vmatpush1.msra.mxu0 %v107
    %319 = vmatprep.subr.mxu0 %v106
    %320 = vmatpush1.msra.mxu0 %v105
    %321 = vmatprep.subr.mxu0 %v104
    %322 = vmatpush1.msra.mxu0 %v103
    %323 = vmatprep.subr.mxu0 %v102
    %324 = vmatpush1.msra.mxu0 %v101
    %325 = vmatprep.subr.mxu0 %v164
    %326 = vmatpush2.msra.mxu0 %v163
    %327 = vmatprep.subr.mxu0 %v162
    %328 = vmatpush2.msra.mxu0 %v161
    %329 = vmatprep.subr.mxu0 %v160
    %330 = vmatpush2.msra.mxu0 %v159
    %331 = vmatprep.subr.mxu0 %v158
    %332 = vmatpush2.msra.mxu0 %v157
    %333 = vmatprep.subr.mxu0 %v156
    %334 = vmatpush2.msra.mxu0 %v155
    %335 = vmatprep.subr.mxu0 %v154
    %336 = vmatpush2.msra.mxu0 %v153
    %337 = vmatprep.subr.mxu0 %v152
    %338 = vmatpush2.msra.mxu0 %v151
    %339 = vmatprep.subr.mxu0 %v150
    %340 = vmatpush2.msra.mxu0 %v149
    %341 = vmatprep.subr.mxu0 %v148
    %342 = vmatpush2.msra.mxu0 %v147
    %343 = vmatprep.subr.mxu0 %v146
    %344 = vmatpush2.msra.mxu0 %v145
    %345 = vmatprep.subr.mxu0 %v144
    %346 = vmatpush2.msra.mxu0 %v143
    %347 = vmatprep.subr.mxu0 %v142
    %348 = vmatpush2.msra.mxu0 %v141
    %349 = vmatprep.subr.mxu0 %v140
    %350 = vmatpush2.msra.mxu0 %v139
    %351 = vmatprep.subr.mxu0 %v138
    %352 = vmatpush2.msra.mxu0 %v137
    %353 = vmatprep.subr.mxu0 %v136
    %354 = vmatpush2.msra.mxu0 %v135
    %355 = vmatprep.subr.mxu0 %v134
    %356 = vmatpush2.msra.mxu0 %v133
    %357 = vmatprep.mubr.f32.mxu0 %v93
    %358 = vmatmul.mubr.f32.gmra.mxu0 %v92
    %v359 = vpop.f32.mrf.mxu0
    %v360 = vadd.f32 0.0, %v359
    %v361 = vpop.f32.mrf.mxu0
    %v362 = vadd.f32 0.0, %v361
    %363 = vmatprep.mubr.f32.mxu0 %v95
    %364 = vmatmul.mubr.f32.gmra.mxu0 %v94
    %v365 = vpop.f32.mrf.mxu0
    %v366 = vadd.f32 0.0, %v365
    %v367 = vpop.f32.mrf.mxu0
    %v368 = vadd.f32 0.0, %v367
    %369 = vdwg.mxu0
    %370 = vmatprep.subr.mxu0 %v196
    %371 = vmatpush1.msra.mxu0 %v195
    %372 = vmatprep.subr.mxu0 %v194
    %373 = vmatpush1.msra.mxu0 %v193
    %374 = vmatprep.subr.mxu0 %v192
    %375 = vmatpush1.msra.mxu0 %v191
    %376 = vmatprep.subr.mxu0 %v190
    %377 = vmatpush1.msra.mxu0 %v189
    %378 = vmatprep.subr.mxu0 %v188
    %379 = vmatpush1.msra.mxu0 %v187
    %380 = vmatprep.subr.mxu0 %v186
    %381 = vmatpush1.msra.mxu0 %v185
    %382 = vmatprep.subr.mxu0 %v184
    %383 = vmatpush1.msra.mxu0 %v183
    %384 = vmatprep.subr.mxu0 %v182
    %385 = vmatpush1.msra.mxu0 %v181
    %386 = vmatprep.subr.mxu0 %v180
    %387 = vmatpush1.msra.mxu0 %v179
    %388 = vmatprep.subr.mxu0 %v178
    %389 = vmatpush1.msra.mxu0 %v177
    %390 = vmatprep.subr.mxu0 %v176
    %391 = vmatpush1.msra.mxu0 %v175
    %392 = vmatprep.subr.mxu0 %v174
    %393 = vmatpush1.msra.mxu0 %v173
    %394 = vmatprep.subr.mxu0 %v172
    %395 = vmatpush1.msra.mxu0 %v171
    %396 = vmatprep.subr.mxu0 %v170
    %397 = vmatpush1.msra.mxu0 %v169
    %398 = vmatprep.subr.mxu0 %v168
    %399 = vmatpush1.msra.mxu0 %v167
    %400 = vmatprep.subr.mxu0 %v166
    %401 = vmatpush1.msra.mxu0 %v165
    %402 = vmatprep.subr.mxu0 %v228
    %403 = vmatpush2.msra.mxu0 %v227
    %404 = vmatprep.subr.mxu0 %v226
    %405 = vmatpush2.msra.mxu0 %v225
    %406 = vmatprep.subr.mxu0 %v224
    %407 = vmatpush2.msra.mxu0 %v223
    %408 = vmatprep.subr.mxu0 %v222
    %409 = vmatpush2.msra.mxu0 %v221
    %410 = vmatprep.subr.mxu0 %v220
    %411 = vmatpush2.msra.mxu0 %v219
    %412 = vmatprep.subr.mxu0 %v218
    %413 = vmatpush2.msra.mxu0 %v217
    %414 = vmatprep.subr.mxu0 %v216
    %415 = vmatpush2.msra.mxu0 %v215
    %416 = vmatprep.subr.mxu0 %v214
    %417 = vmatpush2.msra.mxu0 %v213
    %418 = vmatprep.subr.mxu0 %v212
    %419 = vmatpush2.msra.mxu0 %v211
    %420 = vmatprep.subr.mxu0 %v210
    %421 = vmatpush2.msra.mxu0 %v209
    %422 = vmatprep.subr.mxu0 %v208
    %423 = vmatpush2.msra.mxu0 %v207
    %424 = vmatprep.subr.mxu0 %v206
    %425 = vmatpush2.msra.mxu0 %v205
    %426 = vmatprep.subr.mxu0 %v204
    %427 = vmatpush2.msra.mxu0 %v203
    %428 = vmatprep.subr.mxu0 %v202
    %429 = vmatpush2.msra.mxu0 %v201
    %430 = vmatprep.subr.mxu0 %v200
    %431 = vmatpush2.msra.mxu0 %v199
    %432 = vmatprep.subr.mxu0 %v198
    %433 = vmatpush2.msra.mxu0 %v197
    %434 = vmatprep.mubr.f32.mxu0 %v35
    %435 = vmatmul.mubr.f32.gmra.mxu0 %v34
    %v436 = vpop.f32.mrf.mxu0
    %v437 = vadd.f32 %v360, %v436
    %v438 = vpop.f32.mrf.mxu0
    %v439 = vadd.f32 %v362, %v438
    %440 = vmatprep.mubr.f32.mxu0 %v37
    %441 = vmatmul.mubr.f32.gmra.mxu0 %v36
    %v442 = vpop.f32.mrf.mxu0
    %v443 = vadd.f32 %v366, %v442
    %v444 = vpop.f32.mrf.mxu0
    %v445 = vadd.f32 %v368, %v444
    %446 = vdwg.mxu0
    %447 = vmatprep.subr.mxu0 %v260
    %448 = vmatpush1.msra.mxu0 %v259
    %449 = vmatprep.subr.mxu0 %v258
    %450 = vmatpush1.msra.mxu0 %v257
    %451 = vmatprep.subr.mxu0 %v256
    %452 = vmatpush1.msra.mxu0 %v255
    %453 = vmatprep.subr.mxu0 %v254
    %454 = vmatpush1.msra.mxu0 %v253
    %455 = vmatprep.subr.mxu0 %v252
    %456 = vmatpush1.msra.mxu0 %v251
    %457 = vmatprep.subr.mxu0 %v250
    %458 = vmatpush1.msra.mxu0 %v249
    %459 = vmatprep.subr.mxu0 %v248
    %460 = vmatpush1.msra.mxu0 %v247
    %461 = vmatprep.subr.mxu0 %v246
    %462 = vmatpush1.msra.mxu0 %v245
    %463 = vmatprep.subr.mxu0 %v244
    %464 = vmatpush1.msra.mxu0 %v243
    %465 = vmatprep.subr.mxu0 %v242
    %466 = vmatpush1.msra.mxu0 %v241
    %467 = vmatprep.subr.mxu0 %v240
    %468 = vmatpush1.msra.mxu0 %v239
    %469 = vmatprep.subr.mxu0 %v238
    %470 = vmatpush1.msra.mxu0 %v237
    %471 = vmatprep.subr.mxu0 %v236
    %472 = vmatpush1.msra.mxu0 %v235
    %473 = vmatprep.subr.mxu0 %v234
    %474 = vmatpush1.msra.mxu0 %v233
    %475 = vmatprep.subr.mxu0 %v232
    %476 = vmatpush1.msra.mxu0 %v231
    %477 = vmatprep.subr.mxu0 %v230
    %478 = vmatpush1.msra.mxu0 %v229
    %479 = vmatprep.subr.mxu0 %v292
    %480 = vmatpush2.msra.mxu0 %v291
    %481 = vmatprep.subr.mxu0 %v290
    %482 = vmatpush2.msra.mxu0 %v289
    %483 = vmatprep.subr.mxu0 %v288
    %484 = vmatpush2.msra.mxu0 %v287
    %485 = vmatprep.subr.mxu0 %v286
    %486 = vmatpush2.msra.mxu0 %v285
    %487 = vmatprep.subr.mxu0 %v284
    %488 = vmatpush2.msra.mxu0 %v283
    %489 = vmatprep.subr.mxu0 %v282
    %490 = vmatpush2.msra.mxu0 %v281
    %491 = vmatprep.subr.mxu0 %v280
    %492 = vmatpush2.msra.mxu0 %v279
    %493 = vmatprep.subr.mxu0 %v278
    %494 = vmatpush2.msra.mxu0 %v277
    %495 = vmatprep.subr.mxu0 %v276
    %496 = vmatpush2.msra.mxu0 %v275
    %497 = vmatprep.subr.mxu0 %v274
    %498 = vmatpush2.msra.mxu0 %v273
    %499 = vmatprep.subr.mxu0 %v272
    %500 = vmatpush2.msra.mxu0 %v271
    %501 = vmatprep.subr.mxu0 %v270
    %502 = vmatpush2.msra.mxu0 %v269
    %503 = vmatprep.subr.mxu0 %v268
    %504 = vmatpush2.msra.mxu0 %v267
    %505 = vmatprep.subr.mxu0 %v266
    %506 = vmatpush2.msra.mxu0 %v265
    %507 = vmatprep.subr.mxu0 %v264
    %508 = vmatpush2.msra.mxu0 %v263
    %509 = vmatprep.subr.mxu0 %v262
    %510 = vmatpush2.msra.mxu0 %v261
    %511 = vmatprep.mubr.f32.mxu0 %v98
    %512 = vmatmul.mubr.f32.gmra.mxu0 %v97
    %v513 = vpop.f32.mrf.mxu0
    %v514 = vadd.f32 %v437, %v513
    %v515 = vpop.f32.mrf.mxu0
    %v516 = vadd.f32 %v439, %v515
    %517 = vmatprep.mubr.f32.mxu0 %v100
    %518 = vmatmul.mubr.f32.gmra.mxu0 %v99
    %v519 = vpop.f32.mrf.mxu0
    %v520 = vadd.f32 %v443, %v519
    %v521 = vpop.f32.mrf.mxu0
    %v522 = vadd.f32 %v445, %v521
    %523 = vdwg.mxu0
    %v524 = vrot.slane %v514, 4
    %v525 = vadd.f32 %v514, %v524
    %v526 = vrot.slane %v525, 2
    %v527 = vadd.f32 %v525, %v526
    %v528 = vrot.slane %v527, 1
    %v529 = vadd.f32 %v527, %v528
    %v530 = vrot.slane %v516, 4
    %v531 = vadd.f32 %v516, %v530
    %v532 = vrot.slane %v531, 2
    %v533 = vadd.f32 %v531, %v532
    %v534 = vrot.slane %v533, 1
    %v535 = vadd.f32 %v533, %v534
    %v536 = vrot.slane %v520, 4
    %v537 = vadd.f32 %v520, %v536
    %v538 = vrot.slane %v537, 2
    %v539 = vadd.f32 %v537, %v538
    %v540 = vrot.slane %v539, 1
    %v541 = vadd.f32 %v539, %v540
    %v542 = vrot.slane %v522, 4
    %v543 = vadd.f32 %v522, %v542
    %v544 = vrot.slane %v543, 2
    %v545 = vadd.f32 %v543, %v544
    %v546 = vrot.slane %v545, 1
    %v547 = vadd.f32 %v545, %v546
    %v548 = vmul.f32 %v514, %v514
    %v549 = vmul.f32 %v516, %v516
    %v550 = vmul.f32 %v520, %v520
    %v551 = vmul.f32 %v522, %v522
    %v552 = vrot.slane %v548, 4
    %v553 = vadd.f32 %v548, %v552
    %v554 = vrot.slane %v553, 2
    %v555 = vadd.f32 %v553, %v554
    %v556 = vrot.slane %v555, 1
    %v557 = vadd.f32 %v555, %v556
    %v558 = vrot.slane %v549, 4
    %v559 = vadd.f32 %v549, %v558
    %v560 = vrot.slane %v559, 2
    %v561 = vadd.f32 %v559, %v560
    %v562 = vrot.slane %v561, 1
    %v563 = vadd.f32 %v561, %v562
    %v564 = vrot.slane %v550, 4
    %v565 = vadd.f32 %v550, %v564
    %v566 = vrot.slane %v565, 2
    %v567 = vadd.f32 %v565, %v566
    %v568 = vrot.slane %v567, 1
    %v569 = vadd.f32 %v567, %v568
    %v570 = vrot.slane %v551, 4
    %v571 = vadd.f32 %v551, %v570
    %v572 = vrot.slane %v571, 2
    %v573 = vadd.f32 %v571, %v572
    %v574 = vrot.slane %v573, 1
    %v575 = vadd.f32 %v573, %v574
    %vm580 = vcmask 1041409
    %v581 = vsel %vm580, %v541, %v529
    %v582 = vsel %vm580, %v547, %v535
    %vm589 = vcmask 1043459
    %v590 = vsel %vm589, %v569, %v557
    %v591 = vsel %vm589, %v575, %v563
    %vm594 = vcmask 1041408
    %v595 = vsel %vm594, %v581, %v590
    %v596 = vsel %vm594, %v582, %v591
    %597 = vmatprep.subr.mxu0 0.0
    %598 = vmatpush1.msra.mxu0 %v53
    %599 = vmatprep.subr.mxu0 0.0
    %600 = vmatpush1.msra.mxu0 %v52
    %601 = vmatprep.subr.mxu0 0.0
    %602 = vmatpush1.msra.mxu0 %v51
    %603 = vmatprep.subr.mxu0 0.0
    %604 = vmatpush1.msra.mxu0 %v50
    %605 = vmatprep.subr.mxu0 0.0
    %606 = vmatpush1.msra.mxu0 %v49
    %607 = vmatprep.subr.mxu0 0.0
    %608 = vmatpush1.msra.mxu0 %v48
    %609 = vmatprep.subr.mxu0 0.0
    %610 = vmatpush1.msra.mxu0 %v47
    %611 = vmatprep.subr.mxu0 0.0
    %612 = vmatpush1.msra.mxu0 %v46
    %613 = vmatprep.subr.mxu0 0.0
    %614 = vmatpush1.msra.mxu0 %v45
    %615 = vmatprep.subr.mxu0 0.0
    %616 = vmatpush1.msra.mxu0 %v44
    %617 = vmatprep.subr.mxu0 0.0
    %618 = vmatpush1.msra.mxu0 %v43
    %619 = vmatprep.subr.mxu0 0.0
    %620 = vmatpush1.msra.mxu0 %v42
    %621 = vmatprep.subr.mxu0 0.0
    %622 = vmatpush1.msra.mxu0 %v41
    %623 = vmatprep.subr.mxu0 0.0
    %624 = vmatpush1.msra.mxu0 %v40
    %625 = vmatprep.subr.mxu0 0.0
    %626 = vmatpush1.msra.mxu0 %v39
    %627 = vmatprep.subr.mxu0 0.0
    %628 = vmatpush1.msra.mxu0 %v38
    %629 = vmatprep.subr.mxu0 0.0
    %630 = vmatpush2.msra.mxu0 %v69
    %631 = vmatprep.subr.mxu0 0.0
    %632 = vmatpush2.msra.mxu0 %v68
    %633 = vmatprep.subr.mxu0 0.0
    %634 = vmatpush2.msra.mxu0 %v67
    %635 = vmatprep.subr.mxu0 0.0
    %636 = vmatpush2.msra.mxu0 %v66
    %637 = vmatprep.subr.mxu0 0.0
    %638 = vmatpush2.msra.mxu0 %v65
    %639 = vmatprep.subr.mxu0 0.0
    %640 = vmatpush2.msra.mxu0 %v64
    %641 = vmatprep.subr.mxu0 0.0
    %642 = vmatpush2.msra.mxu0 %v63
    %643 = vmatprep.subr.mxu0 0.0
    %644 = vmatpush2.msra.mxu0 %v62
    %645 = vmatprep.subr.mxu0 0.0
    %646 = vmatpush2.msra.mxu0 %v61
    %647 = vmatprep.subr.mxu0 0.0
    %648 = vmatpush2.msra.mxu0 %v60
    %649 = vmatprep.subr.mxu0 0.0
    %650 = vmatpush2.msra.mxu0 %v59
    %651 = vmatprep.subr.mxu0 0.0
    %652 = vmatpush2.msra.mxu0 %v58
    %653 = vmatprep.subr.mxu0 0.0
    %654 = vmatpush2.msra.mxu0 %v57
    %655 = vmatprep.subr.mxu0 0.0
    %656 = vmatpush2.msra.mxu0 %v56
    %657 = vmatprep.subr.mxu0 0.0
    %658 = vmatpush2.msra.mxu0 %v55
    %659 = vmatprep.subr.mxu0 0.0
    %660 = vmatpush2.msra.mxu0 %v54
    %661 = vmatprep.mubr.f32.mxu0 %v596
    %662 = vmatmul.mubr.f32.gmra.mxu0 %v595
    %v663 = vpop.f32.mrf.mxu0
    %v664 = vadd.f32 0.0, %v663
    %v665 = vpop.f32.mrf.mxu0
    %666 = vdwg.mxu0
    %v667 = vmul.f32 %v664, 0.001953125
    %v668 = vmul.f32 %v667, %v667
    %v670 = vrot.slane %v668, 6
    %v672 = vsub.f32 %v667, %v670
    %v673 = vadd.f32 %v672, 1e-05
    %v674 = vrsqrt.pop %v673
    %v675 = vsub.f32 0.0, %v667
    %v677 = vrot.slane %v674, 2
    %v679 = vmul.f32 %v675, %v677
    %v681 = vrot.slane %v679, 6
    %v683 = vsel %vm594, %v677, %v681
    %v685 = vcombine.high %v70, %v70
    %vm686 = vcmask 31744
    %v688 = vsel %vm686, %v683, 0
    %vm690 = vcmask 1043456
    %v691 = vsel %vm690, %v70, 0
    %v693 = vsel %vm690, %v685, 0
    %695 = vmatprep.subr.mxu0 0.0
    %696 = vmatpush1.msra.mxu0 0.0
    %697 = vmatprep.subr.mxu0 0.0
    %698 = vmatpush1.msra.mxu0 0.0
    %699 = vmatprep.subr.mxu0 0.0
    %700 = vmatpush1.msra.mxu0 0.0
    %701 = vmatprep.subr.mxu0 0.0
    %702 = vmatpush1.msra.mxu0 0.0
    %703 = vmatprep.subr.mxu0 0.0
    %704 = vmatpush1.msra.mxu0 0.0
    %705 = vmatprep.subr.mxu0 0.0
    %706 = vmatpush1.msra.mxu0 0.0
    %707 = vmatprep.subr.mxu0 0.0
    %708 = vmatpush1.msra.mxu0 0.0
    %709 = vmatprep.subr.mxu0 0.0
    %710 = vmatpush1.msra.mxu0 0.0
    %711 = vmatprep.subr.mxu0 0.0
    %712 = vmatpush1.msra.mxu0 0.0
    %713 = vmatprep.subr.mxu0 0.0
    %714 = vmatpush1.msra.mxu0 0.0
    %715 = vmatprep.subr.mxu0 0.0
    %716 = vmatpush1.msra.mxu0 0.0
    %717 = vmatprep.subr.mxu0 0.0
    %718 = vmatpush1.msra.mxu0 0.0
    %719 = vmatprep.subr.mxu0 0.0
    %720 = vmatpush1.msra.mxu0 0.0
    %721 = vmatprep.subr.mxu0 0.0
    %722 = vmatpush1.msra.mxu0 0.0
    %723 = vmatprep.subr.mxu0 0.0
    %724 = vmatpush1.msra.mxu0 0.0
    %725 = vmatprep.subr.mxu0 %v693
    %726 = vmatpush1.msra.mxu0 %v691
    %727 = vmatprep.subr.mxu0 0.0
    %728 = vmatpush2.msra.mxu0 0.0
    %729 = vmatprep.subr.mxu0 0.0
    %730 = vmatpush2.msra.mxu0 0.0
    %731 = vmatprep.subr.mxu0 0.0
    %732 = vmatpush2.msra.mxu0 0.0
    %733 = vmatprep.subr.mxu0 0.0
    %734 = vmatpush2.msra.mxu0 0.0
    %735 = vmatprep.subr.mxu0 0.0
    %736 = vmatpush2.msra.mxu0 0.0
    %737 = vmatprep.subr.mxu0 0.0
    %738 = vmatpush2.msra.mxu0 0.0
    %739 = vmatprep.subr.mxu0 0.0
    %740 = vmatpush2.msra.mxu0 0.0
    %741 = vmatprep.subr.mxu0 0.0
    %742 = vmatpush2.msra.mxu0 0.0
    %743 = vmatprep.subr.mxu0 0.0
    %744 = vmatpush2.msra.mxu0 0.0
    %745 = vmatprep.subr.mxu0 0.0
    %746 = vmatpush2.msra.mxu0 0.0
    %747 = vmatprep.subr.mxu0 0.0
    %748 = vmatpush2.msra.mxu0 0.0
    %749 = vmatprep.subr.mxu0 0.0
    %750 = vmatpush2.msra.mxu0 0.0
    %751 = vmatprep.subr.mxu0 0.0
    %752 = vmatpush2.msra.mxu0 0.0
    %753 = vmatprep.subr.mxu0 0.0
    %754 = vmatpush2.msra.mxu0 0.0
    %755 = vmatprep.subr.mxu0 0.0
    %756 = vmatpush2.msra.mxu0 0.0
    %757 = vmatprep.subr.mxu0 0.0
    %758 = vmatpush2.msra.mxu0 0.0
    %759 = vmatprep.mubr.f32.mxu0 0.0
    %760 = vmatmul.mubr.f32.gmra.mxu0 %v688
    %v761 = vpop.f32.mrf.mxu0
    %v762 = vadd.f32 0.0, %v761
    %v763 = vpop.f32.mrf.mxu0
    %v764 = vadd.f32 0.0, %v763
    %765 = vdwg.mxu0
    %v768 = vcombine.low %v762, %v764
    %v770 = vunpack.c.l.s4 1966171168
    %v771 = vunpack.c.0.s8 %v770
    %v772 = vlaneseq
    %v773 = vshrl.u32 %v772, 7
    %v774 = vsub.s32 %v771, %v773
    %v775 = vrot.slane %v768, %v774
    %v776 = vcombine.high %v775, %v775
    %v778 = vunpack.c.l.s4 1966171168
    %v779 = vunpack.c.0.s8 %v778
    %v780 = vlaneseq
    %v781 = vshrl.u32 %v780, 7
    %v782 = vsub.s32 %v779, %v781
    %v783 = vrot.slane %v775, %v782
    %v785 = vunpack.c.l.s4 1966171168
    %v786 = vunpack.c.0.s8 %v785
    %v787 = vlaneseq
    %v788 = vshrl.u32 %v787, 7
    %v789 = vsub.s32 %v786, %v788
    %v790 = vrot.slane %v776, %v789
    %v791 = vcombine.high %v783, %v783
    %v792 = vcombine.high %v790, %v790
    %v793 = vlaneseq
    %v794 = vshrl.u32 %v793, 7
    %v795 = vsub.s32 0, %v794
    %v796 = vrot.slane %v783, %v795
    %v797 = vlaneseq
    %v798 = vshrl.u32 %v797, 7
    %v799 = vsub.s32 1, %v798
    %v800 = vrot.slane %v783, %v799
    %v801 = vlaneseq
    %v802 = vshrl.u32 %v801, 7
    %v803 = vsub.s32 0, %v802
    %v804 = vrot.slane %v790, %v803
    %v805 = vlaneseq
    %v806 = vshrl.u32 %v805, 7
    %v807 = vsub.s32 1, %v806
    %v808 = vrot.slane %v790, %v807
    %v813 = vmul.f32 %v514, %v796
    %v814 = vmul.f32 %v516, %v800
    %v815 = vmul.f32 %v520, %v804
    %v816 = vmul.f32 %v522, %v808
    %v817 = vlaneseq
    %v818 = vshrl.u32 %v817, 7
    %v819 = vsub.s32 0, %v818
    %v820 = vrot.slane %v791, %v819
    %v821 = vlaneseq
    %v822 = vshrl.u32 %v821, 7
    %v823 = vsub.s32 1, %v822
    %v824 = vrot.slane %v791, %v823
    %v825 = vlaneseq
    %v826 = vshrl.u32 %v825, 7
    %v827 = vsub.s32 0, %v826
    %v828 = vrot.slane %v792, %v827
    %v829 = vlaneseq
    %v830 = vshrl.u32 %v829, 7
    %v831 = vsub.s32 1, %v830
    %v832 = vrot.slane %v792, %v831
    %v837 = vadd.f32 %v813, %v820
    %v838 = vadd.f32 %v814, %v824
    %v839 = vadd.f32 %v815, %v828
    %v840 = vadd.f32 %v816, %v832
    %v841 = vmax.f32 %v837, 0.0
    %v842 = vmax.f32 %v838, 0.0
    %v843 = vmax.f32 %v839, 0.0
    %v844 = vmax.f32 %v840, 0.0
    %v849 = vrot.slane %v841, 1
    %v850 = vrot.slane %v842, 1
    %v851 = vrot.slane %v843, 1
    %v852 = vrot.slane %v844, 1
    %v857 = vrot.slane %v841, 7
    %v858 = vrot.slane %v842, 7
    %v859 = vrot.slane %v843, 7
    %v860 = vrot.slane %v844, 7
    %v865 = vsel %vm91, %v849, %v857
    %v866 = vsel %vm91, %v850, %v858
    %v867 = vsel %vm91, %v851, %v859
    %v868 = vsel %vm91, %v852, %v860
    %v869 = vsel %vm96, %v849, %v857
    %v870 = vsel %vm96, %v850, %v858
    %v871 = vsel %vm96, %v851, %v859
    %v872 = vsel %vm96, %v852, %v860
    %v873 = vld [vmem:[#allocation2] sm:$0xff]
    %v874 = vld [vmem:[#allocation2 + $0x8] sm:$0xff]
    %v875 = vld [vmem:[#allocation2 + $0x10] sm:$0xff]
    %v876 = vld [vmem:[#allocation2 + $0x18] sm:$0xff]
    %v877 = vld [vmem:[#allocation2 + $0x20] sm:$0xff]
    %v878 = vld [vmem:[#allocation2 + $0x28] sm:$0xff]
    %v879 = vld [vmem:[#allocation2 + $0x30] sm:$0xff]
    %v880 = vld [vmem:[#allocation2 + $0x38] sm:$0xff]
    %v881 = vld [vmem:[#allocation2 + $0x40] sm:$0xff]
    %v882 = vld [vmem:[#allocation2 + $0x48] sm:$0xff]
    %v883 = vld [vmem:[#allocation2 + $0x50] sm:$0xff]
    %v884 = vld [vmem:[#allocation2 + $0x58] sm:$0xff]
    %v885 = vld [vmem:[#allocation2 + $0x60] sm:$0xff]
    %v886 = vld [vmem:[#allocation2 + $0x68] sm:$0xff]
    %v887 = vld [vmem:[#allocation2 + $0x70] sm:$0xff]
    %v888 = vld [vmem:[#allocation2 + $0x78] sm:$0xff]
    %v889 = vld [vmem:[#allocation2 + $0x80] sm:$0xff]
    %v890 = vld [vmem:[#allocation2 + $0x88] sm:$0xff]
    %v891 = vld [vmem:[#allocation2 + $0x90] sm:$0xff]
    %v892 = vld [vmem:[#allocation2 + $0x98] sm:$0xff]
    %v893 = vld [vmem:[#allocation2 + $0xa0] sm:$0xff]
    %v894 = vld [vmem:[#allocation2 + $0xa8] sm:$0xff]
    %v895 = vld [vmem:[#allocation2 + $0xb0] sm:$0xff]
    %v896 = vld [vmem:[#allocation2 + $0xb8] sm:$0xff]
    %v897 = vld [vmem:[#allocation2 + $0xc0] sm:$0xff]
    %v898 = vld [vmem:[#allocation2 + $0xc8] sm:$0xff]
    %v899 = vld [vmem:[#allocation2 + $0xd0] sm:$0xff]
    %v900 = vld [vmem:[#allocation2 + $0xd8] sm:$0xff]
    %v901 = vld [vmem:[#allocation2 + $0xe0] sm:$0xff]
    %v902 = vld [vmem:[#allocation2 + $0xe8] sm:$0xff]
    %v903 = vld [vmem:[#allocation2 + $0xf0] sm:$0xff]
    %v904 = vld [vmem:[#allocation2 + $0xf8] sm:$0xff]
    %v905 = vld [vmem:[#allocation2 + $0x100] sm:$0xff]
    %v906 = vld [vmem:[#allocation2 + $0x108] sm:$0xff]
    %v907 = vld [vmem:[#allocation2 + $0x110] sm:$0xff]
    %v908 = vld [vmem:[#allocation2 + $0x118] sm:$0xff]
    %v909 = vld [vmem:[#allocation2 + $0x120] sm:$0xff]
    %v910 = vld [vmem:[#allocation2 + $0x128] sm:$0xff]
    %v911 = vld [vmem:[#allocation2 + $0x130] sm:$0xff]
    %v912 = vld [vmem:[#allocation2 + $0x138] sm:$0xff]
    %v913 = vld [vmem:[#allocation2 + $0x140] sm:$0xff]
    %v914 = vld [vmem:[#allocation2 + $0x148] sm:$0xff]
    %v915 = vld [vmem:[#allocation2 + $0x150] sm:$0xff]
    %v916 = vld [vmem:[#allocation2 + $0x158] sm:$0xff]
    %v917 = vld [vmem:[#allocation2 + $0x160] sm:$0xff]
    %v918 = vld [vmem:[#allocation2 + $0x168] sm:$0xff]
    %v919 = vld [vmem:[#allocation2 + $0x170] sm:$0xff]
    %v920 = vld [vmem:[#allocation2 + $0x178] sm:$0xff]
    %v921 = vld [vmem:[#allocation2 + $0x180] sm:$0xff]
    %v922 = vld [vmem:[#allocation2 + $0x188] sm:$0xff]
    %v923 = vld [vmem:[#allocation2 + $0x190] sm:$0xff]
    %v924 = vld [vmem:[#allocation2 + $0x198] sm:$0xff]
    %v925 = vld [vmem:[#allocation2 + $0x1a0] sm:$0xff]
    %v926 = vld [vmem:[#allocation2 + $0x1a8] sm:$0xff]
    %v927 = vld [vmem:[#allocation2 + $0x1b0] sm:$0xff]
    %v928 = vld [vmem:[#allocation2 + $0x1b8] sm:$0xff]
    %v929 = vld [vmem:[#allocation2 + $0x1c0] sm:$0xff]
    %v930 = vld [vmem:[#allocation2 + $0x1c8] sm:$0xff]
    %v931 = vld [vmem:[#allocation2 + $0x1d0] sm:$0xff]
    %v932 = vld [vmem:[#allocation2 + $0x1d8] sm:$0xff]
    %v933 = vld [vmem:[#allocation2 + $0x1e0] sm:$0xff]
    %v934 = vld [vmem:[#allocation2 + $0x1e8] sm:$0xff]
    %v935 = vld [vmem:[#allocation2 + $0x1f0] sm:$0xff]
    %v936 = vld [vmem:[#allocation2 + $0x1f8] sm:$0xff]
    %v937 = vld [vmem:[#allocation2 + $0x200] sm:$0xff]
    %v938 = vld [vmem:[#allocation2 + $0x208] sm:$0xff]
    %v939 = vld [vmem:[#allocation2 + $0x210] sm:$0xff]
    %v940 = vld [vmem:[#allocation2 + $0x218] sm:$0xff]
    %v941 = vld [vmem:[#allocation2 + $0x220] sm:$0xff]
    %v942 = vld [vmem:[#allocation2 + $0x228] sm:$0xff]
    %v943 = vld [vmem:[#allocation2 + $0x230] sm:$0xff]
    %v944 = vld [vmem:[#allocation2 + $0x238] sm:$0xff]
    %v945 = vld [vmem:[#allocation2 + $0x240] sm:$0xff]
    %v946 = vld [vmem:[#allocation2 + $0x248] sm:$0xff]
    %v947 = vld [vmem:[#allocation2 + $0x250] sm:$0xff]
    %v948 = vld [vmem:[#allocation2 + $0x258] sm:$0xff]
    %v949 = vld [vmem:[#allocation2 + $0x260] sm:$0xff]
    %v950 = vld [vmem:[#allocation2 + $0x268] sm:$0xff]
    %v951 = vld [vmem:[#allocation2 + $0x270] sm:$0xff]
    %v952 = vld [vmem:[#allocation2 + $0x278] sm:$0xff]
    %v953 = vld [vmem:[#allocation2 + $0x280] sm:$0xff]
    %v954 = vld [vmem:[#allocation2 + $0x288] sm:$0xff]
    %v955 = vld [vmem:[#allocation2 + $0x290] sm:$0xff]
    %v956 = vld [vmem:[#allocation2 + $0x298] sm:$0xff]
    %v957 = vld [vmem:[#allocation2 + $0x2a0] sm:$0xff]
    %v958 = vld [vmem:[#allocation2 + $0x2a8] sm:$0xff]
    %v959 = vld [vmem:[#allocation2 + $0x2b0] sm:$0xff]
    %v960 = vld [vmem:[#allocation2 + $0x2b8] sm:$0xff]
    %v961 = vld [vmem:[#allocation2 + $0x2c0] sm:$0xff]
    %v962 = vld [vmem:[#allocation2 + $0x2c8] sm:$0xff]
    %v963 = vld [vmem:[#allocation2 + $0x2d0] sm:$0xff]
    %v964 = vld [vmem:[#allocation2 + $0x2d8] sm:$0xff]
    %v965 = vld [vmem:[#allocation2 + $0x2e0] sm:$0xff]
    %v966 = vld [vmem:[#allocation2 + $0x2e8] sm:$0xff]
    %v967 = vld [vmem:[#allocation2 + $0x2f0] sm:$0xff]
    %v968 = vld [vmem:[#allocation2 + $0x2f8] sm:$0xff]
    %v969 = vld [vmem:[#allocation2 + $0x300] sm:$0xff]
    %v970 = vld [vmem:[#allocation2 + $0x308] sm:$0xff]
    %v971 = vld [vmem:[#allocation2 + $0x310] sm:$0xff]
    %v972 = vld [vmem:[#allocation2 + $0x318] sm:$0xff]
    %v973 = vld [vmem:[#allocation2 + $0x320] sm:$0xff]
    %v974 = vld [vmem:[#allocation2 + $0x328] sm:$0xff]
    %v975 = vld [vmem:[#allocation2 + $0x330] sm:$0xff]
    %v976 = vld [vmem:[#allocation2 + $0x338] sm:$0xff]
    %v977 = vld [vmem:[#allocation2 + $0x340] sm:$0xff]
    %v978 = vld [vmem:[#allocation2 + $0x348] sm:$0xff]
    %v979 = vld [vmem:[#allocation2 + $0x350] sm:$0xff]
    %v980 = vld [vmem:[#allocation2 + $0x358] sm:$0xff]
    %v981 = vld [vmem:[#allocation2 + $0x360] sm:$0xff]
    %v982 = vld [vmem:[#allocation2 + $0x368] sm:$0xff]
    %v983 = vld [vmem:[#allocation2 + $0x370] sm:$0xff]
    %v984 = vld [vmem:[#allocation2 + $0x378] sm:$0xff]
    %v985 = vld [vmem:[#allocation2 + $0x380] sm:$0xff]
    %v986 = vld [vmem:[#allocation2 + $0x388] sm:$0xff]
    %v987 = vld [vmem:[#allocation2 + $0x390] sm:$0xff]
    %v988 = vld [vmem:[#allocation2 + $0x398] sm:$0xff]
    %v989 = vld [vmem:[#allocation2 + $0x3a0] sm:$0xff]
    %v990 = vld [vmem:[#allocation2 + $0x3a8] sm:$0xff]
    %v991 = vld [vmem:[#allocation2 + $0x3b0] sm:$0xff]
    %v992 = vld [vmem:[#allocation2 + $0x3b8] sm:$0xff]
    %v993 = vld [vmem:[#allocation2 + $0x3c0] sm:$0xff]
    %v994 = vld [vmem:[#allocation2 + $0x3c8] sm:$0xff]
    %v995 = vld [vmem:[#allocation2 + $0x3d0] sm:$0xff]
    %v996 = vld [vmem:[#allocation2 + $0x3d8] sm:$0xff]
    %v997 = vld [vmem:[#allocation2 + $0x3e0] sm:$0xff]
    %v998 = vld [vmem:[#allocation2 + $0x3e8] sm:$0xff]
    %v999 = vld [vmem:[#allocation2 + $0x3f0] sm:$0xff]
    %v1000 = vld [vmem:[#allocation2 + $0x3f8] sm:$0xff]
    %v1001 = vld [vmem:[#allocation2 + $0x400] sm:$0xff]
    %v1002 = vld [vmem:[#allocation2 + $0x408] sm:$0xff]
    %v1003 = vld [vmem:[#allocation2 + $0x410] sm:$0xff]
    %v1004 = vld [vmem:[#allocation2 + $0x418] sm:$0xff]
    %v1005 = vld [vmem:[#allocation2 + $0x420] sm:$0xff]
    %v1006 = vld [vmem:[#allocation2 + $0x428] sm:$0xff]
    %v1007 = vld [vmem:[#allocation2 + $0x430] sm:$0xff]
    %v1008 = vld [vmem:[#allocation2 + $0x438] sm:$0xff]
    %v1009 = vld [vmem:[#allocation2 + $0x440] sm:$0xff]
    %v1010 = vld [vmem:[#allocation2 + $0x448] sm:$0xff]
    %v1011 = vld [vmem:[#allocation2 + $0x450] sm:$0xff]
    %v1012 = vld [vmem:[#allocation2 + $0x458] sm:$0xff]
    %v1013 = vld [vmem:[#allocation2 + $0x460] sm:$0xff]
    %v1014 = vld [vmem:[#allocation2 + $0x468] sm:$0xff]
    %v1015 = vld [vmem:[#allocation2 + $0x470] sm:$0xff]
    %v1016 = vld [vmem:[#allocation2 + $0x478] sm:$0xff]
    %v1017 = vld [vmem:[#allocation2 + $0x480] sm:$0xff]
    %v1018 = vld [vmem:[#allocation2 + $0x488] sm:$0xff]
    %v1019 = vld [vmem:[#allocation2 + $0x490] sm:$0xff]
    %v1020 = vld [vmem:[#allocation2 + $0x498] sm:$0xff]
    %v1021 = vld [vmem:[#allocation2 + $0x4a0] sm:$0xff]
    %v1022 = vld [vmem:[#allocation2 + $0x4a8] sm:$0xff]
    %v1023 = vld [vmem:[#allocation2 + $0x4b0] sm:$0xff]
    %v1024 = vld [vmem:[#allocation2 + $0x4b8] sm:$0xff]
    %v1025 = vld [vmem:[#allocation2 + $0x4c0] sm:$0xff]
    %v1026 = vld [vmem:[#allocation2 + $0x4c8] sm:$0xff]
    %v1027 = vld [vmem:[#allocation2 + $0x4d0] sm:$0xff]
    %v1028 = vld [vmem:[#allocation2 + $0x4d8] sm:$0xff]
    %v1029 = vld [vmem:[#allocation2 + $0x4e0] sm:$0xff]
    %v1030 = vld [vmem:[#allocation2 + $0x4e8] sm:$0xff]
    %v1031 = vld [vmem:[#allocation2 + $0x4f0] sm:$0xff]
    %v1032 = vld [vmem:[#allocation2 + $0x4f8] sm:$0xff]
    %v1033 = vld [vmem:[#allocation2 + $0x500] sm:$0xff]
    %v1034 = vld [vmem:[#allocation2 + $0x508] sm:$0xff]
    %v1035 = vld [vmem:[#allocation2 + $0x510] sm:$0xff]
    %v1036 = vld [vmem:[#allocation2 + $0x518] sm:$0xff]
    %v1037 = vld [vmem:[#allocation2 + $0x520] sm:$0xff]
    %v1038 = vld [vmem:[#allocation2 + $0x528] sm:$0xff]
    %v1039 = vld [vmem:[#allocation2 + $0x530] sm:$0xff]
    %v1040 = vld [vmem:[#allocation2 + $0x538] sm:$0xff]
    %v1041 = vld [vmem:[#allocation2 + $0x540] sm:$0xff]
    %v1042 = vld [vmem:[#allocation2 + $0x548] sm:$0xff]
    %v1043 = vld [vmem:[#allocation2 + $0x550] sm:$0xff]
    %v1044 = vld [vmem:[#allocation2 + $0x558] sm:$0xff]
    %v1045 = vld [vmem:[#allocation2 + $0x560] sm:$0xff]
    %v1046 = vld [vmem:[#allocation2 + $0x568] sm:$0xff]
    %v1047 = vld [vmem:[#allocation2 + $0x570] sm:$0xff]
    %v1048 = vld [vmem:[#allocation2 + $0x578] sm:$0xff]
    %v1049 = vld [vmem:[#allocation2 + $0x580] sm:$0xff]
    %v1050 = vld [vmem:[#allocation2 + $0x588] sm:$0xff]
    %v1051 = vld [vmem:[#allocation2 + $0x590] sm:$0xff]
    %v1052 = vld [vmem:[#allocation2 + $0x598] sm:$0xff]
    %v1053 = vld [vmem:[#allocation2 + $0x5a0] sm:$0xff]
    %v1054 = vld [vmem:[#allocation2 + $0x5a8] sm:$0xff]
    %v1055 = vld [vmem:[#allocation2 + $0x5b0] sm:$0xff]
    %v1056 = vld [vmem:[#allocation2 + $0x5b8] sm:$0xff]
    %v1057 = vld [vmem:[#allocation2 + $0x5c0] sm:$0xff]
    %v1058 = vld [vmem:[#allocation2 + $0x5c8] sm:$0xff]
    %v1059 = vld [vmem:[#allocation2 + $0x5d0] sm:$0xff]
    %v1060 = vld [vmem:[#allocation2 + $0x5d8] sm:$0xff]
    %v1061 = vld [vmem:[#allocation2 + $0x5e0] sm:$0xff]
    %v1062 = vld [vmem:[#allocation2 + $0x5e8] sm:$0xff]
    %v1063 = vld [vmem:[#allocation2 + $0x5f0] sm:$0xff]
    %v1064 = vld [vmem:[#allocation2 + $0x5f8] sm:$0xff]
    %1065 = vmatprep.subr.mxu0 %v904
    %1066 = vmatpush1.msra.mxu0 %v903
    %1067 = vmatprep.subr.mxu0 %v902
    %1068 = vmatpush1.msra.mxu0 %v901
    %1069 = vmatprep.subr.mxu0 %v900
    %1070 = vmatpush1.msra.mxu0 %v899
    %1071 = vmatprep.subr.mxu0 %v898
    %1072 = vmatpush1.msra.mxu0 %v897
    %1073 = vmatprep.subr.mxu0 %v896
    %1074 = vmatpush1.msra.mxu0 %v895
    %1075 = vmatprep.subr.mxu0 %v894
    %1076 = vmatpush1.msra.mxu0 %v893
    %1077 = vmatprep.subr.mxu0 %v892
    %1078 = vmatpush1.msra.mxu0 %v891
    %1079 = vmatprep.subr.mxu0 %v890
    %1080 = vmatpush1.msra.mxu0 %v889
    %1081 = vmatprep.subr.mxu0 %v888
    %1082 = vmatpush1.msra.mxu0 %v887
    %1083 = vmatprep.subr.mxu0 %v886
    %1084 = vmatpush1.msra.mxu0 %v885
    %1085 = vmatprep.subr.mxu0 %v884
    %1086 = vmatpush1.msra.mxu0 %v883
    %1087 = vmatprep.subr.mxu0 %v882
    %1088 = vmatpush1.msra.mxu0 %v881
    %1089 = vmatprep.subr.mxu0 %v880
    %1090 = vmatpush1.msra.mxu0 %v879
    %1091 = vmatprep.subr.mxu0 %v878
    %1092 = vmatpush1.msra.mxu0 %v877
    %1093 = vmatprep.subr.mxu0 %v876
    %1094 = vmatpush1.msra.mxu0 %v875
    %1095 = vmatprep.subr.mxu0 %v874
    %1096 = vmatpush1.msra.mxu0 %v873
    %1097 = vmatprep.subr.mxu0 %v936
    %1098 = vmatpush2.msra.mxu0 %v935
    %1099 = vmatprep.subr.mxu0 %v934
    %1100 = vmatpush2.msra.mxu0 %v933
    %1101 = vmatprep.subr.mxu0 %v932
    %1102 = vmatpush2.msra.mxu0 %v931
    %1103 = vmatprep.subr.mxu0 %v930
    %1104 = vmatpush2.msra.mxu0 %v929
    %1105 = vmatprep.subr.mxu0 %v928
    %1106 = vmatpush2.msra.mxu0 %v927
    %1107 = vmatprep.subr.mxu0 %v926
    %1108 = vmatpush2.msra.mxu0 %v925
    %1109 = vmatprep.subr.mxu0 %v924
    %1110 = vmatpush2.msra.mxu0 %v923
    %1111 = vmatprep.subr.mxu0 %v922
    %1112 = vmatpush2.msra.mxu0 %v921
    %1113 = vmatprep.subr.mxu0 %v920
    %1114 = vmatpush2.msra.mxu0 %v919
    %1115 = vmatprep.subr.mxu0 %v918
    %1116 = vmatpush2.msra.mxu0 %v917
    %1117 = vmatprep.subr.mxu0 %v916
    %1118 = vmatpush2.msra.mxu0 %v915
    %1119 = vmatprep.subr.mxu0 %v914
    %1120 = vmatpush2.msra.mxu0 %v913
    %1121 = vmatprep.subr.mxu0 %v912
    %1122 = vmatpush2.msra.mxu0 %v911
    %1123 = vmatprep.subr.mxu0 %v910
    %1124 = vmatpush2.msra.mxu0 %v909
    %1125 = vmatprep.subr.mxu0 %v908
    %1126 = vmatpush2.msra.mxu0 %v907
    %1127 = vmatprep.subr.mxu0 %v906
    %1128 = vmatpush2.msra.mxu0 %v905
    %1129 = vmatprep.mubr.f32.mxu0 %v866
    %1130 = vmatmul.mubr.f32.gmra.mxu0 %v865
    %v1131 = vpop.f32.mrf.mxu0
    %v1132 = vadd.f32 0.0, %v1131
    %v1133 = vpop.f32.mrf.mxu0
    %v1134 = vadd.f32 0.0, %v1133
    %1135 = vmatprep.mubr.f32.mxu0 %v868
    %1136 = vmatmul.mubr.f32.gmra.mxu0 %v867
    %v1137 = vpop.f32.mrf.mxu0
    %v1138 = vadd.f32 0.0, %v1137
    %v1139 = vpop.f32.mrf.mxu0
    %v1140 = vadd.f32 0.0, %v1139
    %1141 = vdwg.mxu0
    %1142 = vmatprep.subr.mxu0 %v968
    %1143 = vmatpush1.msra.mxu0 %v967
    %1144 = vmatprep.subr.mxu0 %v966
    %1145 = vmatpush1.msra.mxu0 %v965
    %1146 = vmatprep.subr.mxu0 %v964
    %1147 = vmatpush1.msra.mxu0 %v963
    %1148 = vmatprep.subr.mxu0 %v962
    %1149 = vmatpush1.msra.mxu0 %v961
    %1150 = vmatprep.subr.mxu0 %v960
    %1151 = vmatpush1.msra.mxu0 %v959
    %1152 = vmatprep.subr.mxu0 %v958
    %1153 = vmatpush1.msra.mxu0 %v957
    %1154 = vmatprep.subr.mxu0 %v956
    %1155 = vmatpush1.msra.mxu0 %v955
    %1156 = vmatprep.subr.mxu0 %v954
    %1157 = vmatpush1.msra.mxu0 %v953
    %1158 = vmatprep.subr.mxu0 %v952
    %1159 = vmatpush1.msra.mxu0 %v951
    %1160 = vmatprep.subr.mxu0 %v950
    %1161 = vmatpush1.msra.mxu0 %v949
    %1162 = vmatprep.subr.mxu0 %v948
    %1163 = vmatpush1.msra.mxu0 %v947
    %1164 = vmatprep.subr.mxu0 %v946
    %1165 = vmatpush1.msra.mxu0 %v945
    %1166 = vmatprep.subr.mxu0 %v944
    %1167 = vmatpush1.msra.mxu0 %v943
    %1168 = vmatprep.subr.mxu0 %v942
    %1169 = vmatpush1.msra.mxu0 %v941
    %1170 = vmatprep.subr.mxu0 %v940
    %1171 = vmatpush1.msra.mxu0 %v939
    %1172 = vmatprep.subr.mxu0 %v938
    %1173 = vmatpush1.msra.mxu0 %v937
    %1174 = vmatprep.subr.mxu0 %v1000
    %1175 = vmatpush2.msra.mxu0 %v999
    %1176 = vmatprep.subr.mxu0 %v998
    %1177 = vmatpush2.msra.mxu0 %v997
    %1178 = vmatprep.subr.mxu0 %v996
    %1179 = vmatpush2.msra.mxu0 %v995
    %1180 = vmatprep.subr.mxu0 %v994
    %1181 = vmatpush2.msra.mxu0 %v993
    %1182 = vmatprep.subr.mxu0 %v992
    %1183 = vmatpush2.msra.mxu0 %v991
    %1184 = vmatprep.subr.mxu0 %v990
    %1185 = vmatpush2.msra.mxu0 %v989
    %1186 = vmatprep.subr.mxu0 %v988
    %1187 = vmatpush2.msra.mxu0 %v987
    %1188 = vmatprep.subr.mxu0 %v986
    %1189 = vmatpush2.msra.mxu0 %v985
    %1190 = vmatprep.subr.mxu0 %v984
    %1191 = vmatpush2.msra.mxu0 %v983
    %1192 = vmatprep.subr.mxu0 %v982
    %1193 = vmatpush2.msra.mxu0 %v981
    %1194 = vmatprep.subr.mxu0 %v980
    %1195 = vmatpush2.msra.mxu0 %v979
    %1196 = vmatprep.subr.mxu0 %v978
    %1197 = vmatpush2.msra.mxu0 %v977
    %1198 = vmatprep.subr.mxu0 %v976
    %1199 = vmatpush2.msra.mxu0 %v975
    %1200 = vmatprep.subr.mxu0 %v974
    %1201 = vmatpush2.msra.mxu0 %v973
    %1202 = vmatprep.subr.mxu0 %v972
    %1203 = vmatpush2.msra.mxu0 %v971
    %1204 = vmatprep.subr.mxu0 %v970
    %1205 = vmatpush2.msra.mxu0 %v969
    %1206 = vmatprep.mubr.f32.mxu0 %v842
    %1207 = vmatmul.mubr.f32.gmra.mxu0 %v841
    %v1208 = vpop.f32.mrf.mxu0
    %v1209 = vadd.f32 %v1132, %v1208
    %v1210 = vpop.f32.mrf.mxu0
    %v1211 = vadd.f32 %v1134, %v1210
    %1212 = vmatprep.mubr.f32.mxu0 %v844
    %1213 = vmatmul.mubr.f32.gmra.mxu0 %v843
    %v1214 = vpop.f32.mrf.mxu0
    %v1215 = vadd.f32 %v1138, %v1214
    %v1216 = vpop.f32.mrf.mxu0
    %v1217 = vadd.f32 %v1140, %v1216
    %1218 = vdwg.mxu0
    %1219 = vmatprep.subr.mxu0 %v1032
    %1220 = vmatpush1.msra.mxu0 %v1031
    %1221 = vmatprep.subr.mxu0 %v1030
    %1222 = vmatpush1.msra.mxu0 %v1029
    %1223 = vmatprep.subr.mxu0 %v1028
    %1224 = vmatpush1.msra.mxu0 %v1027
    %1225 = vmatprep.subr.mxu0 %v1026
    %1226 = vmatpush1.msra.mxu0 %v1025
    %1227 = vmatprep.subr.mxu0 %v1024
    %1228 = vmatpush1.msra.mxu0 %v1023
    %1229 = vmatprep.subr.mxu0 %v1022
    %1230 = vmatpush1.msra.mxu0 %v1021
    %1231 = vmatprep.subr.mxu0 %v1020
    %1232 = vmatpush1.msra.mxu0 %v1019
    %1233 = vmatprep.subr.mxu0 %v1018
    %1234 = vmatpush1.msra.mxu0 %v1017
    %1235 = vmatprep.subr.mxu0 %v1016
    %1236 = vmatpush1.msra.mxu0 %v1015
    %1237 = vmatprep.subr.mxu0 %v1014
    %1238 = vmatpush1.msra.mxu0 %v1013
    %1239 = vmatprep.subr.mxu0 %v1012
    %1240 = vmatpush1.msra.mxu0 %v1011
    %1241 = vmatprep.subr.mxu0 %v1010
    %1242 = vmatpush1.msra.mxu0 %v1009
    %1243 = vmatprep.subr.mxu0 %v1008
    %1244 = vmatpush1.msra.mxu0 %v1007
    %1245 = vmatprep.subr.mxu0 %v1006
    %1246 = vmatpush1.msra.mxu0 %v1005
    %1247 = vmatprep.subr.mxu0 %v1004
    %1248 = vmatpush1.msra.mxu0 %v1003
    %1249 = vmatprep.subr.mxu0 %v1002
    %1250 = vmatpush1.msra.mxu0 %v1001
    %1251 = vmatprep.subr.mxu0 %v1064
    %1252 = vmatpush2.msra.mxu0 %v1063
    %1253 = vmatprep.subr.mxu0 %v1062
    %1254 = vmatpush2.msra.mxu0 %v1061
    %1255 = vmatprep.subr.mxu0 %v1060
    %1256 = vmatpush2.msra.mxu0 %v1059
    %1257 = vmatprep.subr.mxu0 %v1058
    %1258 = vmatpush2.msra.mxu0 %v1057
    %1259 = vmatprep.subr.mxu0 %v1056
    %1260 = vmatpush2.msra.mxu0 %v1055
    %1261 = vmatprep.subr.mxu0 %v1054
    %1262 = vmatpush2.msra.mxu0 %v1053
    %1263 = vmatprep.subr.mxu0 %v1052
    %1264 = vmatpush2.msra.mxu0 %v1051
    %1265 = vmatprep.subr.mxu0 %v1050
    %1266 = vmatpush2.msra.mxu0 %v1049
    %1267 = vmatprep.subr.mxu0 %v1048
    %1268 = vmatpush2.msra.mxu0 %v1047
    %1269 = vmatprep.subr.mxu0 %v1046
    %1270 = vmatpush2.msra.mxu0 %v1045
    %1271 = vmatprep.subr.mxu0 %v1044
    %1272 = vmatpush2.msra.mxu0 %v1043
    %1273 = vmatprep.subr.mxu0 %v1042
    %1274 = vmatpush2.msra.mxu0 %v1041
    %1275 = vmatprep.subr.mxu0 %v1040
    %1276 = vmatpush2.msra.mxu0 %v1039
    %1277 = vmatprep.subr.mxu0 %v1038
    %1278 = vmatpush2.msra.mxu0 %v1037
    %1279 = vmatprep.subr.mxu0 %v1036
    %1280 = vmatpush2.msra.mxu0 %v1035
    %1281 = vmatprep.subr.mxu0 %v1034
    %1282 = vmatpush2.msra.mxu0 %v1033
    %1283 = vmatprep.mubr.f32.mxu0 %v870
    %1284 = vmatmul.mubr.f32.gmra.mxu0 %v869
    %v1285 = vpop.f32.mrf.mxu0
    %v1286 = vadd.f32 %v1209, %v1285
    %v1287 = vpop.f32.mrf.mxu0
    %v1288 = vadd.f32 %v1211, %v1287
    %1289 = vmatprep.mubr.f32.mxu0 %v872
    %1290 = vmatmul.mubr.f32.gmra.mxu0 %v871
    %v1291 = vpop.f32.mrf.mxu0
    %v1292 = vadd.f32 %v1215, %v1291
    %v1293 = vpop.f32.mrf.mxu0
    %v1294 = vadd.f32 %v1217, %v1293
    %1295 = vdwg.mxu0
    %v1296 = vrot.slane %v1286, 4
    %v1297 = vadd.f32 %v1286, %v1296
    %v1298 = vrot.slane %v1297, 2
    %v1299 = vadd.f32 %v1297, %v1298
    %v1300 = vrot.slane %v1299, 1
    %v1301 = vadd.f32 %v1299, %v1300
    %v1302 = vrot.slane %v1288, 4
    %v1303 = vadd.f32 %v1288, %v1302
    %v1304 = vrot.slane %v1303, 2
    %v1305 = vadd.f32 %v1303, %v1304
    %v1306 = vrot.slane %v1305, 1
    %v1307 = vadd.f32 %v1305, %v1306
    %v1308 = vrot.slane %v1292, 4
    %v1309 = vadd.f32 %v1292, %v1308
    %v1310 = vrot.slane %v1309, 2
    %v1311 = vadd.f32 %v1309, %v1310
    %v1312 = vrot.slane %v1311, 1
    %v1313 = vadd.f32 %v1311, %v1312
    %v1314 = vrot.slane %v1294, 4
    %v1315 = vadd.f32 %v1294, %v1314
    %v1316 = vrot.slane %v1315, 2
    %v1317 = vadd.f32 %v1315, %v1316
    %v1318 = vrot.slane %v1317, 1
    %v1319 = vadd.f32 %v1317, %v1318
    %v1320 = vmul.f32 %v1286, %v1286
    %v1321 = vmul.f32 %v1288, %v1288
    %v1322 = vmul.f32 %v1292, %v1292
    %v1323 = vmul.f32 %v1294, %v1294
    %v1324 = vrot.slane %v1320, 4
    %v1325 = vadd.f32 %v1320, %v1324
    %v1326 = vrot.slane %v1325, 2
    %v1327 = vadd.f32 %v1325, %v1326
    %v1328 = vrot.slane %v1327, 1
    %v1329 = vadd.f32 %v1327, %v1328
    %v1330 = vrot.slane %v1321, 4
    %v1331 = vadd.f32 %v1321, %v1330
    %v1332 = vrot.slane %v1331, 2
    %v1333 = vadd.f32 %v1331, %v1332
    %v1334 = vrot.slane %v1333, 1
    %v1335 = vadd.f32 %v1333, %v1334
    %v1336 = vrot.slane %v1322, 4
    %v1337 = vadd.f32 %v1322, %v1336
    %v1338 = vrot.slane %v1337, 2
    %v1339 = vadd.f32 %v1337, %v1338
    %v1340 = vrot.slane %v1339, 1
    %v1341 = vadd.f32 %v1339, %v1340
    %v1342 = vrot.slane %v1323, 4
    %v1343 = vadd.f32 %v1323, %v1342
    %v1344 = vrot.slane %v1343, 2
    %v1345 = vadd.f32 %v1343, %v1344
    %v1346 = vrot.slane %v1345, 1
    %v1347 = vadd.f32 %v1345, %v1346
    %v1352 = vsel %vm580, %v1313, %v1301
    %v1353 = vsel %vm580, %v1319, %v1307
    %v1360 = vsel %vm589, %v1341, %v1329
    %v1361 = vsel %vm589, %v1347, %v1335
    %v1364 = vsel %vm594, %v1352, %v1360
    %v1365 = vsel %vm594, %v1353, %v1361
    %1366 = vmatprep.subr.mxu0 0.0
    %1367 = vmatpush1.msra.mxu0 %v53
    %1368 = vmatprep.subr.mxu0 0.0
    %1369 = vmatpush1.msra.mxu0 %v52
    %1370 = vmatprep.subr.mxu0 0.0
    %1371 = vmatpush1.msra.mxu0 %v51
    %1372 = vmatprep.subr.mxu0 0.0
    %1373 = vmatpush1.msra.mxu0 %v50
    %1374 = vmatprep.subr.mxu0 0.0
    %1375 = vmatpush1.msra.mxu0 %v49
    %1376 = vmatprep.subr.mxu0 0.0
    %1377 = vmatpush1.msra.mxu0 %v48
    %1378 = vmatprep.subr.mxu0 0.0
    %1379 = vmatpush1.msra.mxu0 %v47
    %1380 = vmatprep.subr.mxu0 0.0
    %1381 = vmatpush1.msra.mxu0 %v46
    %1382 = vmatprep.subr.mxu0 0.0
    %1383 = vmatpush1.msra.mxu0 %v45
    %1384 = vmatprep.subr.mxu0 0.0
    %1385 = vmatpush1.msra.mxu0 %v44
    %1386 = vmatprep.subr.mxu0 0.0
    %1387 = vmatpush1.msra.mxu0 %v43
    %1388 = vmatprep.subr.mxu0 0.0
    %1389 = vmatpush1.msra.mxu0 %v42
    %1390 = vmatprep.subr.mxu0 0.0
    %1391 = vmatpush1.msra.mxu0 %v41
    %1392 = vmatprep.subr.mxu0 0.0
    %1393 = vmatpush1.msra.mxu0 %v40
    %1394 = vmatprep.subr.mxu0 0.0
    %1395 = vmatpush1.msra.mxu0 %v39
    %1396 = vmatprep.subr.mxu0 0.0
    %1397 = vmatpush1.msra.mxu0 %v38
    %1398 = vmatprep.subr.mxu0 0.0
    %1399 = vmatpush2.msra.mxu0 %v69
    %1400 = vmatprep.subr.mxu0 0.0
    %1401 = vmatpush2.msra.mxu0 %v68
    %1402 = vmatprep.subr.mxu0 0.0
    %1403 = vmatpush2.msra.mxu0 %v67
    %1404 = vmatprep.subr.mxu0 0.0
    %1405 = vmatpush2.msra.mxu0 %v66
    %1406 = vmatprep.subr.mxu0 0.0
    %1407 = vmatpush2.msra.mxu0 %v65
    %1408 = vmatprep.subr.mxu0 0.0
    %1409 = vmatpush2.msra.mxu0 %v64
    %1410 = vmatprep.subr.mxu0 0.0
    %1411 = vmatpush2.msra.mxu0 %v63
    %1412 = vmatprep.subr.mxu0 0.0
    %1413 = vmatpush2.msra.mxu0 %v62
    %1414 = vmatprep.subr.mxu0 0.0
    %1415 = vmatpush2.msra.mxu0 %v61
    %1416 = vmatprep.subr.mxu0 0.0
    %1417 = vmatpush2.msra.mxu0 %v60
    %1418 = vmatprep.subr.mxu0 0.0
    %1419 = vmatpush2.msra.mxu0 %v59
    %1420 = vmatprep.subr.mxu0 0.0
    %1421 = vmatpush2.msra.mxu0 %v58
    %1422 = vmatprep.subr.mxu0 0.0
    %1423 = vmatpush2.msra.mxu0 %v57
    %1424 = vmatprep.subr.mxu0 0.0
    %1425 = vmatpush2.msra.mxu0 %v56
    %1426 = vmatprep.subr.mxu0 0.0
    %1427 = vmatpush2.msra.mxu0 %v55
    %1428 = vmatprep.subr.mxu0 0.0
    %1429 = vmatpush2.msra.mxu0 %v54
    %1430 = vmatprep.mubr.f32.mxu0 %v1365
    %1431 = vmatmul.mubr.f32.gmra.mxu0 %v1364
    %v1432 = vpop.f32.mrf.mxu0
    %v1433 = vadd.f32 0.0, %v1432
    %v1434 = vpop.f32.mrf.mxu0
    %1435 = vdwg.mxu0
    %v1436 = vmul.f32 %v1433, 0.001953125
    %v1437 = vmul.f32 %v1436, %v1436
    %v1439 = vrot.slane %v1437, 6
    %v1441 = vsub.f32 %v1436, %v1439
    %v1442 = vadd.f32 %v1441, 1e-05
    %v1443 = vrsqrt.pop %v1442
    %v1444 = vsub.f32 0.0, %v1436
    %v1446 = vrot.slane %v1443, 2
    %v1448 = vmul.f32 %v1444, %v1446
    %v1450 = vrot.slane %v1448, 6
    %v1452 = vsel %vm594, %v1446, %v1450
    %v1454 = vsel %vm686, %v1452, 0
    %1456 = vmatprep.subr.mxu0 0.0
    %1457 = vmatpush1.msra.mxu0 0.0
    %1458 = vmatprep.subr.mxu0 0.0
    %1459 = vmatpush1.msra.mxu0 0.0
    %1460 = vmatprep.subr.mxu0 0.0
    %1461 = vmatpush1.msra.mxu0 0.0
    %1462 = vmatprep.subr.mxu0 0.0
    %1463 = vmatpush1.msra.mxu0 0.0
    %1464 = vmatprep.subr.mxu0 0.0
    %1465 = vmatpush1.msra.mxu0 0.0
    %1466 = vmatprep.subr.mxu0 0.0
    %1467 = vmatpush1.msra.mxu0 0.0
    %1468 = vmatprep.subr.mxu0 0.0
    %1469 = vmatpush1.msra.mxu0 0.0
    %1470 = vmatprep.subr.mxu0 0.0
    %1471 = vmatpush1.msra.mxu0 0.0
    %1472 = vmatprep.subr.mxu0 0.0
    %1473 = vmatpush1.msra.mxu0 0.0
    %1474 = vmatprep.subr.mxu0 0.0
    %1475 = vmatpush1.msra.mxu0 0.0
    %1476 = vmatprep.subr.mxu0 0.0
    %1477 = vmatpush1.msra.mxu0 0.0
    %1478 = vmatprep.subr.mxu0 0.0
    %1479 = vmatpush1.msra.mxu0 0.0
    %1480 = vmatprep.subr.mxu0 0.0
    %1481 = vmatpush1.msra.mxu0 0.0
    %1482 = vmatprep.subr.mxu0 0.0
    %1483 = vmatpush1.msra.mxu0 0.0
    %1484 = vmatprep.subr.mxu0 0.0
    %1485 = vmatpush1.msra.mxu0 0.0
    %1486 = vmatprep.subr.mxu0 %v693
    %1487 = vmatpush1.msra.mxu0 %v691
    %1488 = vmatprep.subr.mxu0 0.0
    %1489 = vmatpush2.msra.mxu0 0.0
    %1490 = vmatprep.subr.mxu0 0.0
    %1491 = vmatpush2.msra.mxu0 0.0
    %1492 = vmatprep.subr.mxu0 0.0
    %1493 = vmatpush2.msra.mxu0 0.0
    %1494 = vmatprep.subr.mxu0 0.0
    %1495 = vmatpush2.msra.mxu0 0.0
    %1496 = vmatprep.subr.mxu0 0.0
    %1497 = vmatpush2.msra.mxu0 0.0
    %1498 = vmatprep.subr.mxu0 0.0
    %1499 = vmatpush2.msra.mxu0 0.0
    %1500 = vmatprep.subr.mxu0 0.0
    %1501 = vmatpush2.msra.mxu0 0.0
    %1502 = vmatprep.subr.mxu0 0.0
    %1503 = vmatpush2.msra.mxu0 0.0
    %1504 = vmatprep.subr.mxu0 0.0
    %1505 = vmatpush2.msra.mxu0 0.0
    %1506 = vmatprep.subr.mxu0 0.0
    %1507 = vmatpush2.msra.mxu0 0.0
    %1508 = vmatprep.subr.mxu0 0.0
    %1509 = vmatpush2.msra.mxu0 0.0
    %1510 = vmatprep.subr.mxu0 0.0
    %1511 = vmatpush2.msra.mxu0 0.0
    %1512 = vmatprep.subr.mxu0 0.0
    %1513 = vmatpush2.msra.mxu0 0.0
    %1514 = vmatprep.subr.mxu0 0.0
    %1515 = vmatpush2.msra.mxu0 0.0
    %1516 = vmatprep.subr.mxu0 0.0
    %1517 = vmatpush2.msra.mxu0 0.0
    %1518 = vmatprep.subr.mxu0 0.0
    %1519 = vmatpush2.msra.mxu0 0.0
    %1520 = vmatprep.mubr.f32.mxu0 0.0
    %1521 = vmatmul.mubr.f32.gmra.mxu0 %v1454
    %v1522 = vpop.f32.mrf.mxu0
    %v1523 = vadd.f32 0.0, %v1522
    %v1524 = vpop.f32.mrf.mxu0
    %v1525 = vadd.f32 0.0, %v1524
    %1526 = vdwg.mxu0
    %v1529 = vcombine.low %v1523, %v1525
    %v1531 = vunpack.c.l.s4 1966171168
    %v1532 = vunpack.c.0.s8 %v1531
    %v1533 = vlaneseq
    %v1534 = vshrl.u32 %v1533, 7
    %v1535 = vsub.s32 %v1532, %v1534
    %v1536 = vrot.slane %v1529, %v1535
    %v1537 = vcombine.high %v1536, %v1536
    %v1539 = vunpack.c.l.s4 1966171168
    %v1540 = vunpack.c.0.s8 %v1539
    %v1541 = vlaneseq
    %v1542 = vshrl.u32 %v1541, 7
    %v1543 = vsub.s32 %v1540, %v1542
    %v1544 = vrot.slane %v1536, %v1543
    %v1546 = vunpack.c.l.s4 1966171168
    %v1547 = vunpack.c.0.s8 %v1546
    %v1548 = vlaneseq
    %v1549 = vshrl.u32 %v1548, 7
    %v1550 = vsub.s32 %v1547, %v1549
    %v1551 = vrot.slane %v1537, %v1550
    %v1552 = vcombine.high %v1544, %v1544
    %v1553 = vcombine.high %v1551, %v1551
    %v1554 = vlaneseq
    %v1555 = vshrl.u32 %v1554, 7
    %v1556 = vsub.s32 0, %v1555
    %v1557 = vrot.slane %v1544, %v1556
    %v1558 = vlaneseq
    %v1559 = vshrl.u32 %v1558, 7
    %v1560 = vsub.s32 1, %v1559
    %v1561 = vrot.slane %v1544, %v1560
    %v1562 = vlaneseq
    %v1563 = vshrl.u32 %v1562, 7
    %v1564 = vsub.s32 0, %v1563
    %v1565 = vrot.slane %v1551, %v1564
    %v1566 = vlaneseq
    %v1567 = vshrl.u32 %v1566, 7
    %v1568 = vsub.s32 1, %v1567
    %v1569 = vrot.slane %v1551, %v1568
    %v1574 = vmul.f32 %v1286, %v1557
    %v1575 = vmul.f32 %v1288, %v1561
    %v1576 = vmul.f32 %v1292, %v1565
    %v1577 = vmul.f32 %v1294, %v1569
    %v1578 = vlaneseq
    %v1579 = vshrl.u32 %v1578, 7
    %v1580 = vsub.s32 0, %v1579
    %v1581 = vrot.slane %v1552, %v1580
    %v1582 = vlaneseq
    %v1583 = vshrl.u32 %v1582, 7
    %v1584 = vsub.s32 1, %v1583
    %v1585 = vrot.slane %v1552, %v1584
    %v1586 = vlaneseq
    %v1587 = vshrl.u32 %v1586, 7
    %v1588 = vsub.s32 0, %v1587
    %v1589 = vrot.slane %v1553, %v1588
    %v1590 = vlaneseq
    %v1591 = vshrl.u32 %v1590, 7
    %v1592 = vsub.s32 1, %v1591
    %v1593 = vrot.slane %v1553, %v1592
    %v1598 = vadd.f32 %v1574, %v1581
    %v1599 = vadd.f32 %v1575, %v1585
    %v1600 = vadd.f32 %v1576, %v1589
    %v1601 = vadd.f32 %v1577, %v1593
    %v1602 = vadd.f32 %v34, %v1598
    %v1603 = vadd.f32 %v35, %v1599
    %v1604 = vadd.f32 %v36, %v1600
    %v1605 = vadd.f32 %v37, %v1601
    %1606 = vst [vmem:[%s5] sm:$0xff] %v1602
    %1607 = vst [vmem:[%s5 + $0x8] sm:$0xff] %v1603
    %1608 = vst [vmem:[%s5 + $0x10] sm:$0xff] %v1604
    %1609 = vst [vmem:[%s5 + $0x18] sm:$0xff] %v1605
    // Predicated region
    $region26: #{resnet_block_forward.1} parent=1 // pred_check
      _
    $region27: #{resnet_block_forward.1} parent=1 // pred_check_branch
      %1611 = sbr.rel (0) target = $region29
    $region28: #{resnet_block_forward.1} parent=1 // pred_region
      _
    $region29: #{resnet_block_forward.1} parent=1 // pred_fallthru
      _
    // Predicated region
    $region30: #{resnet_block_forward.1} parent=1 // pred_check
      _
    $region31: #{resnet_block_forward.1} parent=1 // pred_check_branch
      %1613 = sbr.rel (0) target = $region33
    $region32: #{resnet_block_forward.1} parent=1 // pred_region
      _
    $region33: #{resnet_block_forward.1} parent=1 // pred_fallthru
      _
    %1614 = vsyncpa [#allocation3], 1

</llo_original>
